<compile_context>
chip_gen: v6e
topology: v6e:2x2x1
jax: 0.10.0
libtpu: 0.0.40
codegen_flags: <defaults>
</compile_context>

<pallas_src>
import jax
import jax.numpy as jnp
from jax.experimental import pallas as pl
from jax.experimental.pallas import tpu as pltpu

LANE = 128
K_IN = 784          # 28*28*1 (nn.Flatten on NCHW)
K_PAD = 896         # 7 * 128 -> full-width MXU K passes / aligned x row loads
NUM_CLASSES = 10
CLASS_PAD = 128     # lane-dense output slab (unmasked vst)
NEG_INF = -1e30     # padded-class logit bias; exp underflows to exactly 0 in f32


def mlp_kernel(x_ref, w1_ref, b1_ref, w2_ref, b2_ref, w3_ref, b3_ref, o_ref):
    # x_ref: (TB, K_PAD) bf16; w*_ref bf16; b*_ref f32; o_ref (TB, CLASS_PAD) f32.
    x = x_ref[...]

    # Linear 1 (bf16 MXU, f32 accumulate) + bias + ReLU. Dropout (eval) = identity.
    h1 = jnp.dot(x, w1_ref[...], preferred_element_type=jnp.float32)
    h1 = h1 + b1_ref[...]
    h1 = jnp.maximum(h1, 0.0)

    # Linear 2. Dropout (eval) = identity.
    h2 = jnp.dot(h1.astype(jnp.bfloat16), w2_ref[...],
                 preferred_element_type=jnp.float32)
    h2 = h2 + b2_ref[...]

    # Linear 3 -> padded logits; padded classes get a -1e30 bias (zero weight cols).
    logits = jnp.dot(h2.astype(jnp.bfloat16), w3_ref[...],
                     preferred_element_type=jnp.float32)
    logits = logits + b3_ref[...]

    # Numerically stable softmax over the padded class dim; padded classes contribute
    # exp(-1e30 - m) == 0, so normalization over the real 10 classes is exact.
    m = jnp.max(logits, axis=-1, keepdims=True)
    e = jnp.exp(logits - m)
    denom = jnp.sum(e, axis=-1, keepdims=True)
    o_ref[...] = (e * pl.reciprocal(denom, approx=True)).astype(o_ref.dtype)


def mnist_mlp_forward(x, params, *, tb=128):
    """x: (B, 1, 28, 28) float32 NCHW. Returns softmax probabilities (B, 10) in f32.

    tb: batch tile (rows per grid step). 128 matches the v5e MXU height; 256+ also
    fine on v6e/v7x at large B. Per-step VMEM (~1 MiB with tb=128) is far below the
    32 MiB scoped default on every generation, so no vmem_limit bump is needed.
    """
    w1, b1, w2, b2, w3, b3 = params          # weights stored (in_features, out_features)
    B = x.shape[0]
    x_flat = x.reshape(B, -1)                # nn.Flatten on NCHW with C=1
    assert x_flat.shape[1] == K_IN

    L1 = w1.shape[1]
    L2 = w2.shape[1]
    assert L1 % LANE == 0, "layer_1_size must be a multiple of 128 for this kernel"
    L2p = ((L2 + LANE - 1) // LANE) * LANE   # pad L2 (e.g. 64 -> 128) for lane-dense h2
    B_pad = ((B + tb - 1) // tb) * tb        # pad batch to a whole number of tiles

    f32, bf16 = jnp.float32, jnp.bfloat16

    # One-time padding / casting in the wrapper (zero padding is numerically exact).
    xp = jnp.zeros((B_pad, K_PAD), bf16).at[:B, :K_IN].set(x_flat.astype(bf16))
    w1p = jnp.zeros((K_PAD, L1), bf16).at[:K_IN, :].set(w1.astype(bf16))
    b1p = b1.astype(f32)
    w2p = jnp.zeros((L1, L2p), bf16).at[:, :L2].set(w2.astype(bf16))
    b2p = jnp.zeros((1, L2p), f32).at[:, :L2].set(b2.astype(f32))
    w3p = jnp.zeros((L2p, CLASS_PAD), bf16).at[:L2, :NUM_CLASSES].set(w3.astype(bf16))
    b3p = jnp.full((1, CLASS_PAD), NEG_INF, f32).at[:, :NUM_CLASSES].set(b3.astype(f32))

    grid = (B_pad // tb,)
    const = lambda shape: pl.BlockSpec(shape, lambda i: (0, 0))  # VMEM-resident across steps

    flops = 2 * B_pad * (K_PAD * L1 + L1 * L2p + L2p * CLASS_PAD)
    bytes_accessed = (
        xp.size * 2 + w1p.size * 2 + w2p.size * 2 + w3p.size * 2
        + (b1p.size + b2p.size + b3p.size) * 4
        + B_pad * CLASS_PAD * 4
    )
    cost = pl.CostEstimate(flops=flops,
                           transcendentals=B_pad * CLASS_PAD,
                           bytes_accessed=bytes_accessed)

    out = pl.pallas_call(
        mlp_kernel,
        out_shape=jax.ShapeDtypeStruct((B_pad, CLASS_PAD), jnp.float32),
        grid_spec=pltpu.PrefetchScalarGridSpec(
            num_scalar_prefetch=0,
            grid=grid,
            in_specs=[
                pl.BlockSpec((tb, K_PAD), lambda i: (i, 0)),   # x: batch-tiled, pipelined
                const((K_PAD, L1)),
                const((1, L1)),
                const((L1, L2p)),
                const((1, L2p)),
                const((L2p, CLASS_PAD)),
                const((1, CLASS_PAD)),
            ],
            out_specs=pl.BlockSpec((tb, CLASS_PAD), lambda i: (i, 0)),
        ),
        compiler_params=pltpu.CompilerParams(
            dimension_semantics=("parallel",)),
        cost_estimate=cost,
    )(xp, w1p, b1p, w2p, b2p, w3p, b3p)

    return out[:B, :NUM_CLASSES]


def init_params(key, layer_1_size, layer_2_size):
    """Deterministic init mimicking nn.Linear's uniform(-1/sqrt(fan_in), 1/sqrt(fan_in))."""
    def linear(key, fan_in, fan_out):
        kw, kb = jax.random.split(key)
        bound = 1.0 / jnp.sqrt(jnp.float32(fan_in))
        w = jax.random.uniform(kw, (fan_in, fan_out), jnp.float32, -bound, bound)
        b = jax.random.uniform(kb, (1, fan_out), jnp.float32, -bound, bound)
        return w, b

    k1, k2, k3 = jax.random.split(key, 3)
    w1, b1 = linear(k1, K_IN, layer_1_size)
    w2, b2 = linear(k2, layer_1_size, layer_2_size)
    w3, b3 = linear(k3, layer_2_size, 10)
    return (w1, b1, w2, b2, w3, b3)


def reference_forward(x, params):
    """Pure-JAX f32 reference for correctness checking."""
    w1, b1, w2, b2, w3, b3 = params
    h = x.reshape(x.shape[0], -1)
    h = jnp.maximum(h @ w1 + b1, 0.0)
    h = h @ w2 + b2
    logits = h @ w3 + b3
    return jax.nn.softmax(logits, axis=-1)


if __name__ == "__main__":
    layer_1_size = 128
    layer_2_size = 64
    dropout_rate = 0.25  # eval-mode dropout -> identity; kept for signature fidelity

    key = jax.random.PRNGKey(0)
    k_params, k_x = jax.random.split(key)

    params = init_params(k_params, layer_1_size, layer_2_size)
    # MNIST-shaped input, small batch: (B, C, H, W) = (2, 1, 28, 28)
    x = jax.random.normal(k_x, (2, 1, 28, 28), dtype=jnp.float32)

    out = mnist_mlp_forward(x, params)
    out = jax.block_until_ready(out)

    ref = reference_forward(x, params)
    assert out.shape == (2, 10)
    # Loosened tolerances: bf16 MXU operands + approx reciprocal vs f32 reference.
    assert jnp.allclose(jnp.sum(out, axis=-1), 1.0, atol=5e-3)
    assert jnp.allclose(out, ref, atol=2e-2, rtol=2e-2)

    print("KERNEL_OK")
</pallas_src>

<mosaic_0001>
module attributes {stable_mosaic.version = 11 : i64} {
  func.func @mlp_kernel(%arg0: i32, %arg1: memref<128x896xbf16, #tpu.memory_space<vmem>>, %arg2: memref<896x128xbf16, #tpu.memory_space<vmem>>, %arg3: memref<1x128xf32, #tpu.memory_space<vmem>>, %arg4: memref<128x128xbf16, #tpu.memory_space<vmem>>, %arg5: memref<1x128xf32, #tpu.memory_space<vmem>>, %arg6: memref<128x128xbf16, #tpu.memory_space<vmem>>, %arg7: memref<1x128xf32, #tpu.memory_space<vmem>>, %arg8: memref<128x128xf32, #tpu.memory_space<vmem>>) attributes {dimension_semantics = [#tpu.dimension_semantics<parallel>], iteration_bounds = array<i64: 1>, scalar_prefetch = 0 : i64, scratch_operands = 0 : i64, tpu.core_type = #tpu.core_type<tc>, window_params = [{transform_indices = @transform_0, window_bounds = array<i64: 128, 896>}, {pipeline_mode = #tpu.pipeline_mode<synchronous>, transform_indices = @transform_1, window_bounds = array<i64: 896, 128>}, {pipeline_mode = #tpu.pipeline_mode<synchronous>, transform_indices = @transform_2, window_bounds = array<i64: 1, 128>}, {pipeline_mode = #tpu.pipeline_mode<synchronous>, transform_indices = @transform_3, window_bounds = array<i64: 128, 128>}, {pipeline_mode = #tpu.pipeline_mode<synchronous>, transform_indices = @transform_4, window_bounds = array<i64: 1, 128>}, {pipeline_mode = #tpu.pipeline_mode<synchronous>, transform_indices = @transform_5, window_bounds = array<i64: 128, 128>}, {pipeline_mode = #tpu.pipeline_mode<synchronous>, transform_indices = @transform_6, window_bounds = array<i64: 1, 128>}, {transform_indices = @transform_7, window_bounds = array<i64: 128, 128>}]} {
    %c0 = arith.constant 0 : index
    %c0_0 = arith.constant 0 : index
    %0 = vector.load %arg1[%c0, %c0_0] : memref<128x896xbf16, #tpu.memory_space<vmem>>, vector<128x896xbf16>
    %c0_1 = arith.constant 0 : index
    %c0_2 = arith.constant 0 : index
    %1 = vector.load %arg2[%c0_1, %c0_2] : memref<896x128xbf16, #tpu.memory_space<vmem>>, vector<896x128xbf16>
    %cst = arith.constant dense<0.000000e+00> : vector<128x128xf32>
    %2 = tpu.matmul %0, %1, %cst {dimension_numbers = #tpu.dot_dimension_numbers<[1], [0], [0], [1], [0, 0, 1, 1], [], []>} : vector<128x896xbf16>, vector<896x128xbf16>, vector<128x128xf32> -> vector<128x128xf32>
    %c0_3 = arith.constant 0 : index
    %c0_4 = arith.constant 0 : index
    %3 = vector.load %arg3[%c0_3, %c0_4] : memref<1x128xf32, #tpu.memory_space<vmem>>, vector<1x128xf32>
    %4 = vector.broadcast %3 : vector<1x128xf32> to vector<128x128xf32>
    %5 = arith.addf %2, %4 : vector<128x128xf32>
    %cst_5 = arith.constant 0.000000e+00 : f32
    %6 = vector.broadcast %cst_5 : f32 to vector<128x128xf32>
    %7 = arith.maximumf %5, %6 : vector<128x128xf32>
    %8 = arith.truncf %7 : vector<128x128xf32> to vector<128x128xbf16>
    %c0_6 = arith.constant 0 : index
    %c0_7 = arith.constant 0 : index
    %9 = vector.load %arg4[%c0_6, %c0_7] : memref<128x128xbf16, #tpu.memory_space<vmem>>, vector<128x128xbf16>
    %cst_8 = arith.constant dense<0.000000e+00> : vector<128x128xf32>
    %10 = tpu.matmul %8, %9, %cst_8 {dimension_numbers = #tpu.dot_dimension_numbers<[1], [0], [0], [1], [0, 0, 1, 1], [], []>} : vector<128x128xbf16>, vector<128x128xbf16>, vector<128x128xf32> -> vector<128x128xf32>
    %c0_9 = arith.constant 0 : index
    %c0_10 = arith.constant 0 : index
    %11 = vector.load %arg5[%c0_9, %c0_10] : memref<1x128xf32, #tpu.memory_space<vmem>>, vector<1x128xf32>
    %12 = vector.broadcast %11 : vector<1x128xf32> to vector<128x128xf32>
    %13 = arith.addf %10, %12 : vector<128x128xf32>
    %14 = arith.truncf %13 : vector<128x128xf32> to vector<128x128xbf16>
    %c0_11 = arith.constant 0 : index
    %c0_12 = arith.constant 0 : index
    %15 = vector.load %arg6[%c0_11, %c0_12] : memref<128x128xbf16, #tpu.memory_space<vmem>>, vector<128x128xbf16>
    %cst_13 = arith.constant dense<0.000000e+00> : vector<128x128xf32>
    %16 = tpu.matmul %14, %15, %cst_13 {dimension_numbers = #tpu.dot_dimension_numbers<[1], [0], [0], [1], [0, 0, 1, 1], [], []>} : vector<128x128xbf16>, vector<128x128xbf16>, vector<128x128xf32> -> vector<128x128xf32>
    %c0_14 = arith.constant 0 : index
    %c0_15 = arith.constant 0 : index
    %17 = vector.load %arg7[%c0_14, %c0_15] : memref<1x128xf32, #tpu.memory_space<vmem>>, vector<1x128xf32>
    %18 = vector.broadcast %17 : vector<1x128xf32> to vector<128x128xf32>
    %19 = arith.addf %16, %18 : vector<128x128xf32>
    %cst_16 = arith.constant dense<0xFF800000> : vector<128xf32>
    %20 = vector.multi_reduction <maximumf>, %19, %cst_16 [1] : vector<128x128xf32> to vector<128xf32>
    %21 = vector.shape_cast %20 : vector<128xf32> to vector<128x1xf32>
    %22 = vector.broadcast %21 : vector<128x1xf32> to vector<128x128xf32>
    %23 = arith.subf %19, %22 : vector<128x128xf32>
    %24 = math.exp %23 : vector<128x128xf32>
    %cst_17 = arith.constant dense<0.000000e+00> : vector<128xf32>
    %25 = vector.multi_reduction <add>, %24, %cst_17 [1] : vector<128x128xf32> to vector<128xf32>
    %26 = vector.shape_cast %25 : vector<128xf32> to vector<128x1xf32>
    %27 = tpu.reciprocal %26 {approx = true} : vector<128x1xf32> -> vector<128x1xf32>
    %28 = vector.broadcast %27 : vector<128x1xf32> to vector<128x128xf32>
    %29 = arith.mulf %24, %28 : vector<128x128xf32>
    %c0_18 = arith.constant 0 : index
    %c0_19 = arith.constant 0 : index
    %30 = vector.load %arg8[%c0_18, %c0_19] : memref<128x128xf32, #tpu.memory_space<vmem>>, vector<128x128xf32>
    tpu.vector_store %arg8[%c0_18, %c0_19], %29 {strides = array<i32>} : memref<128x128xf32, #tpu.memory_space<vmem>>, vector<128x128xf32>,
    return
  }
  func.func @transform_0(%arg0: i32) -> (i32, i32) {
    %c0_i32 = arith.constant 0 : i32
    %c0_i32_0 = arith.constant 0 : i32
    return %arg0, %c0_i32 : i32, i32
  }
  func.func @transform_1(%arg0: i32) -> (i32, i32) {
    %c0_i32 = arith.constant 0 : i32
    %c0_i32_0 = arith.constant 0 : i32
    %c0_i32_1 = arith.constant 0 : i32
    return %c0_i32, %c0_i32_0 : i32, i32
  }
  func.func @transform_2(%arg0: i32) -> (i32, i32) {
    %c0_i32 = arith.constant 0 : i32
    %c0_i32_0 = arith.constant 0 : i32
    %c0_i32_1 = arith.constant 0 : i32
    return %c0_i32, %c0_i32_0 : i32, i32
  }
  func.func @transform_3(%arg0: i32) -> (i32, i32) {
    %c0_i32 = arith.constant 0 : i32
    %c0_i32_0 = arith.constant 0 : i32
    %c0_i32_1 = arith.constant 0 : i32
    return %c0_i32, %c0_i32_0 : i32, i32
  }
  func.func @transform_4(%arg0: i32) -> (i32, i32) {
    %c0_i32 = arith.constant 0 : i32
    %c0_i32_0 = arith.constant 0 : i32
    %c0_i32_1 = arith.constant 0 : i32
    return %c0_i32, %c0_i32_0 : i32, i32
  }
  func.func @transform_5(%arg0: i32) -> (i32, i32) {
    %c0_i32 = arith.constant 0 : i32
    %c0_i32_0 = arith.constant 0 : i32
    %c0_i32_1 = arith.constant 0 : i32
    return %c0_i32, %c0_i32_0 : i32, i32
  }
  func.func @transform_6(%arg0: i32) -> (i32, i32) {
    %c0_i32 = arith.constant 0 : i32
    %c0_i32_0 = arith.constant 0 : i32
    %c0_i32_1 = arith.constant 0 : i32
    return %c0_i32, %c0_i32_0 : i32, i32
  }
  func.func @transform_7(%arg0: i32) -> (i32, i32) {
    %c0_i32 = arith.constant 0 : i32
    %c0_i32_0 = arith.constant 0 : i32
    return %arg0, %c0_i32 : i32, i32
  }
}

</mosaic_0001>

<llo_original>
// kernel: tpu_custom_call.1
$region0: #{tpu_custom_call.1}
  #allocation0 [shape = 'u32[]', space=smem, size = 0x4, offset = 0x4, fixed_abs, tag = 'smem constant byte address 0x4 - core index']
  #allocation1 [shape = 'u32[144,128]{1,0:T(1,128)}', space=vmem, size = 0x12000, scoped, tag = 'internal scratch']
  %s0 = inlined_call_operand.hbm [shape: bf16[128,896], index: 0, kind: input, shape index: {}]
  %s1 = inlined_call_operand.hbm [shape: bf16[896,128], index: 1, kind: input, shape index: {}]
  %s2 = inlined_call_operand.vmem [shape: f32[1,128], index: 2, kind: input, shape index: {}]
  %s3 = inlined_call_operand.hbm [shape: bf16[128,128], index: 3, kind: input, shape index: {}]
  %s4 = inlined_call_operand.vmem [shape: f32[1,128], index: 4, kind: input, shape index: {}]
  %s5 = inlined_call_operand.hbm [shape: bf16[128,128], index: 5, kind: input, shape index: {}]
  %s6 = inlined_call_operand.vmem [shape: f32[1,128], index: 6, kind: input, shape index: {}]
  %s7 = inlined_call_operand.hbm [shape: f32[128,128], index: 7, kind: output, shape index: {}]
  %s8 = sld [smem:[#allocation0]]
  $region54: #{tpu_custom_call.1} parent=0
    _
  %s10 = ssub.s32 1, %s8
  %s11 = scalar_select 0, %s10, %s8
  $region1: #{tpu_custom_call.1} parent=0
    #allocation2 [shape = 'u8[229376]{0}', space=vmem, size = 0x38000, scoped, tag = 'input window, operand 0, single buffered']
    #allocation3 [shape = 's32[1]{0}', space=sflag, size = 0x4, scoped, tag = 'scoped memory for tpu_custom_call.1']
    #allocation4 [shape = 's32[1]{0}', space=sflag, size = 0x4, scoped, tag = 'scoped memory for tpu_custom_call.1']
    #allocation5 [shape = 'u8[229376]{0}', space=vmem, size = 0x38000, scoped, tag = 'input window, operand 1, single buffered']
    #allocation6 [shape = 's32[1]{0}', space=sflag, size = 0x4, scoped, tag = 'scoped memory for tpu_custom_call.1']
    #allocation7 [shape = 'u8[32768]{0}', space=vmem, size = 0x8000, scoped, tag = 'input window, operand 3, single buffered']
    #allocation8 [shape = 'u8[32768]{0}', space=vmem, size = 0x8000, scoped, tag = 'input window, operand 5, single buffered']
    #allocation9 [shape = 's32[1]{0}', space=sflag, size = 0x4, scoped, tag = 'scoped memory for tpu_custom_call.1']
    #allocation10 [shape = 'u8[65536]{0}', space=vmem, size = 0x10000, scoped, tag = 'output window, operand 0, single buffered']
    %12 = vsyncpa [#allocation3], 0
    %13 = vsyncpa [#allocation6], 0
    %14 = vsyncpa [#allocation9], 0
    %15 = vsyncpa [#allocation4], 0
    // Predicated region
    $region2: #{tpu_custom_call.1} parent=1 // pred_check
      _
    $region3: #{tpu_custom_call.1} parent=1 // pred_check_branch
      %17 = sbr.rel (0) target = $region5
    $region4: #{tpu_custom_call.1} parent=1 // pred_region
      %s19 = ssub.s32 7168, 7168
      %20 = vsyncadd [#allocation3], %s19
      %s21 = sshll.u32 [#allocation2], 4
      %s22 = int_to_ptr.vmem [resolvable:$true] %s21
      %27 = dma.hbm_to_vmem [thread:$0]  %s0, 7168, %s22, [#allocation3], 448, 448, 28
    $region5: #{tpu_custom_call.1} parent=1 // pred_fallthru
      _
    // Predicated region
    $region6: #{tpu_custom_call.1} parent=1 // pred_check
      _
    $region7: #{tpu_custom_call.1} parent=1 // pred_check_branch
      %29 = sbr.rel (0) target = $region9
    $region8: #{tpu_custom_call.1} parent=1 // pred_region
      %s31 = ssub.s32 7168, 7168
      %32 = vsyncadd [#allocation6], %s31
      %s33 = sshll.u32 [#allocation5], 4
      %s34 = int_to_ptr.vmem [resolvable:$true] %s33
      %39 = dma.hbm_to_vmem [thread:$0]  %s1, 7168, %s34, [#allocation6], 64, 64, 4
    $region9: #{tpu_custom_call.1} parent=1 // pred_fallthru
      _
    // Predicated region
    $region10: #{tpu_custom_call.1} parent=1 // pred_check
      _
    $region11: #{tpu_custom_call.1} parent=1 // pred_check_branch
      %41 = sbr.rel (0) target = $region13
    $region12: #{tpu_custom_call.1} parent=1 // pred_region
      _
    $region13: #{tpu_custom_call.1} parent=1 // pred_fallthru
      _
    // Predicated region
    $region14: #{tpu_custom_call.1} parent=1 // pred_check
      _
    $region15: #{tpu_custom_call.1} parent=1 // pred_check_branch
      %43 = sbr.rel (0) target = $region17
    $region16: #{tpu_custom_call.1} parent=1 // pred_region
      %s45 = ssub.s32 1024, 1024
      %46 = vsyncadd [#allocation6], %s45
      %s47 = sshll.u32 [#allocation7], 4
      %s48 = int_to_ptr.vmem [resolvable:$true] %s47
      %53 = dma.hbm_to_vmem [thread:$0]  %s3, 1024, %s48, [#allocation6], 64, 64, 4
    $region17: #{tpu_custom_call.1} parent=1 // pred_fallthru
      _
    // Predicated region
    $region18: #{tpu_custom_call.1} parent=1 // pred_check
      _
    $region19: #{tpu_custom_call.1} parent=1 // pred_check_branch
      %55 = sbr.rel (0) target = $region21
    $region20: #{tpu_custom_call.1} parent=1 // pred_region
      _
    $region21: #{tpu_custom_call.1} parent=1 // pred_fallthru
      _
    // Predicated region
    $region22: #{tpu_custom_call.1} parent=1 // pred_check
      _
    $region23: #{tpu_custom_call.1} parent=1 // pred_check_branch
      %57 = sbr.rel (0) target = $region25
    $region24: #{tpu_custom_call.1} parent=1 // pred_region
      %s59 = ssub.s32 1024, 1024
      %60 = vsyncadd [#allocation9], %s59
      %s61 = sshll.u32 [#allocation8], 4
      %s62 = int_to_ptr.vmem [resolvable:$true] %s61
      %67 = dma.hbm_to_vmem [thread:$0]  %s5, 1024, %s62, [#allocation9], 64, 64, 4
    $region25: #{tpu_custom_call.1} parent=1 // pred_fallthru
      _
    // Predicated region
    $region26: #{tpu_custom_call.1} parent=1 // pred_check
      _
    $region27: #{tpu_custom_call.1} parent=1 // pred_check_branch
      %69 = sbr.rel (0) target = $region29
    $region28: #{tpu_custom_call.1} parent=1 // pred_region
      _
    $region29: #{tpu_custom_call.1} parent=1 // pred_fallthru
      _
    // Predicated region
    $region30: #{tpu_custom_call.1} parent=1 // pred_check
      _
    $region31: #{tpu_custom_call.1} parent=1 // pred_check_branch
      %71 = sbr.rel (0) target = $region33
    $region32: #{tpu_custom_call.1} parent=1 // pred_region
      %72 = dma.done [#allocation3], 7168
    $region33: #{tpu_custom_call.1} parent=1 // pred_fallthru
      _
    // Predicated region
    $region34: #{tpu_custom_call.1} parent=1 // pred_check
      _
    $region35: #{tpu_custom_call.1} parent=1 // pred_check_branch
      %74 = sbr.rel (0) target = $region37
    $region36: #{tpu_custom_call.1} parent=1 // pred_region
      %75 = dma.done [#allocation6], 7168
    $region37: #{tpu_custom_call.1} parent=1 // pred_fallthru
      _
    // Predicated region
    $region38: #{tpu_custom_call.1} parent=1 // pred_check
      _
    $region39: #{tpu_custom_call.1} parent=1 // pred_check_branch
      %77 = sbr.rel (0) target = $region41
    $region40: #{tpu_custom_call.1} parent=1 // pred_region
      %78 = dma.done [#allocation6], 1024
    $region41: #{tpu_custom_call.1} parent=1 // pred_fallthru
      _
    // Predicated region
    $region42: #{tpu_custom_call.1} parent=1 // pred_check
      _
    $region43: #{tpu_custom_call.1} parent=1 // pred_check_branch
      %80 = sbr.rel (0) target = $region45
    $region44: #{tpu_custom_call.1} parent=1 // pred_region
      %81 = dma.done [#allocation9], 1024
    $region45: #{tpu_custom_call.1} parent=1 // pred_fallthru
      _
    %v83 = vld [vmem:[#allocation2] sm:$0xff]
    %v84 = vld [vmem:[#allocation2 + $0x8] sm:$0xff]
    %v85 = vld [vmem:[#allocation2 + $0x10] sm:$0xff]
    %v86 = vld [vmem:[#allocation2 + $0x18] sm:$0xf]
    %v87 = vld [vmem:[#allocation2 + $0x1c] sm:$0xff]
    %v88 = vld [vmem:[#allocation2 + $0x24] sm:$0xff]
    %v89 = vld [vmem:[#allocation2 + $0x2c] sm:$0xff]
    %v90 = vld [vmem:[#allocation2 + $0x34] sm:$0xf]
    %v91 = vld [vmem:[#allocation2 + $0x38] sm:$0xff]
    %v92 = vld [vmem:[#allocation2 + $0x40] sm:$0xff]
    %v93 = vld [vmem:[#allocation2 + $0x48] sm:$0xff]
    %v94 = vld [vmem:[#allocation2 + $0x50] sm:$0xf]
    %v95 = vld [vmem:[#allocation2 + $0x54] sm:$0xff]
    %v96 = vld [vmem:[#allocation2 + $0x5c] sm:$0xff]
    %v97 = vld [vmem:[#allocation2 + $0x64] sm:$0xff]
    %v98 = vld [vmem:[#allocation2 + $0x6c] sm:$0xf]
    %v99 = vld [vmem:[#allocation2 + $0x70] sm:$0xff]
    %v100 = vld [vmem:[#allocation2 + $0x78] sm:$0xff]
    %v101 = vld [vmem:[#allocation2 + $0x80] sm:$0xff]
    %v102 = vld [vmem:[#allocation2 + $0x88] sm:$0xf]
    %v103 = vld [vmem:[#allocation2 + $0x8c] sm:$0xff]
    %v104 = vld [vmem:[#allocation2 + $0x94] sm:$0xff]
    %v105 = vld [vmem:[#allocation2 + $0x9c] sm:$0xff]
    %v106 = vld [vmem:[#allocation2 + $0xa4] sm:$0xf]
    %v107 = vld [vmem:[#allocation2 + $0xa8] sm:$0xff]
    %v108 = vld [vmem:[#allocation2 + $0xb0] sm:$0xff]
    %v109 = vld [vmem:[#allocation2 + $0xb8] sm:$0xff]
    %v110 = vld [vmem:[#allocation2 + $0xc0] sm:$0xf]
    %v111 = vld [vmem:[#allocation2 + $0xc4] sm:$0xff]
    %v112 = vld [vmem:[#allocation2 + $0xcc] sm:$0xff]
    %v113 = vld [vmem:[#allocation2 + $0xd4] sm:$0xff]
    %v114 = vld [vmem:[#allocation2 + $0xdc] sm:$0xf]
    %v115 = vld [vmem:[#allocation2 + $0xe0] sm:$0xff]
    %v116 = vld [vmem:[#allocation2 + $0xe8] sm:$0xff]
    %v117 = vld [vmem:[#allocation2 + $0xf0] sm:$0xff]
    %v118 = vld [vmem:[#allocation2 + $0xf8] sm:$0xf]
    %v119 = vld [vmem:[#allocation2 + $0xfc] sm:$0xff]
    %v120 = vld [vmem:[#allocation2 + $0x104] sm:$0xff]
    %v121 = vld [vmem:[#allocation2 + $0x10c] sm:$0xff]
    %v122 = vld [vmem:[#allocation2 + $0x114] sm:$0xf]
    %v123 = vld [vmem:[#allocation2 + $0x118] sm:$0xff]
    %v124 = vld [vmem:[#allocation2 + $0x120] sm:$0xff]
    %v125 = vld [vmem:[#allocation2 + $0x128] sm:$0xff]
    %v126 = vld [vmem:[#allocation2 + $0x130] sm:$0xf]
    %v127 = vld [vmem:[#allocation2 + $0x134] sm:$0xff]
    %v128 = vld [vmem:[#allocation2 + $0x13c] sm:$0xff]
    %v129 = vld [vmem:[#allocation2 + $0x144] sm:$0xff]
    %v130 = vld [vmem:[#allocation2 + $0x14c] sm:$0xf]
    %v131 = vld [vmem:[#allocation2 + $0x150] sm:$0xff]
    %v132 = vld [vmem:[#allocation2 + $0x158] sm:$0xff]
    %v133 = vld [vmem:[#allocation2 + $0x160] sm:$0xff]
    %v134 = vld [vmem:[#allocation2 + $0x168] sm:$0xf]
    %v135 = vld [vmem:[#allocation2 + $0x16c] sm:$0xff]
    %v136 = vld [vmem:[#allocation2 + $0x174] sm:$0xff]
    %v137 = vld [vmem:[#allocation2 + $0x17c] sm:$0xff]
    %v138 = vld [vmem:[#allocation2 + $0x184] sm:$0xf]
    %v139 = vld [vmem:[#allocation2 + $0x188] sm:$0xff]
    %v140 = vld [vmem:[#allocation2 + $0x190] sm:$0xff]
    %v141 = vld [vmem:[#allocation2 + $0x198] sm:$0xff]
    %v142 = vld [vmem:[#allocation2 + $0x1a0] sm:$0xf]
    %v143 = vld [vmem:[#allocation2 + $0x1a4] sm:$0xff]
    %v144 = vld [vmem:[#allocation2 + $0x1ac] sm:$0xff]
    %v145 = vld [vmem:[#allocation2 + $0x1b4] sm:$0xff]
    %v146 = vld [vmem:[#allocation2 + $0x1bc] sm:$0xf]
    %v147 = vld [vmem:[#allocation5] sm:$0xf]
    %v148 = vld [vmem:[#allocation5 + $0x4] sm:$0xf]
    %v149 = vld [vmem:[#allocation5 + $0x8] sm:$0xf]
    %v150 = vld [vmem:[#allocation5 + $0xc] sm:$0xf]
    %v151 = vld [vmem:[#allocation5 + $0x10] sm:$0xf]
    %v152 = vld [vmem:[#allocation5 + $0x14] sm:$0xf]
    %v153 = vld [vmem:[#allocation5 + $0x18] sm:$0xf]
    %v154 = vld [vmem:[#allocation5 + $0x1c] sm:$0xf]
    %v155 = vld [vmem:[#allocation5 + $0x20] sm:$0xf]
    %v156 = vld [vmem:[#allocation5 + $0x24] sm:$0xf]
    %v157 = vld [vmem:[#allocation5 + $0x28] sm:$0xf]
    %v158 = vld [vmem:[#allocation5 + $0x2c] sm:$0xf]
    %v159 = vld [vmem:[#allocation5 + $0x30] sm:$0xf]
    %v160 = vld [vmem:[#allocation5 + $0x34] sm:$0xf]
    %v161 = vld [vmem:[#allocation5 + $0x38] sm:$0xf]
    %v162 = vld [vmem:[#allocation5 + $0x3c] sm:$0xf]
    %v163 = vld [vmem:[#allocation5 + $0x40] sm:$0xf]
    %v164 = vld [vmem:[#allocation5 + $0x44] sm:$0xf]
    %v165 = vld [vmem:[#allocation5 + $0x48] sm:$0xf]
    %v166 = vld [vmem:[#allocation5 + $0x4c] sm:$0xf]
    %v167 = vld [vmem:[#allocation5 + $0x50] sm:$0xf]
    %v168 = vld [vmem:[#allocation5 + $0x54] sm:$0xf]
    %v169 = vld [vmem:[#allocation5 + $0x58] sm:$0xf]
    %v170 = vld [vmem:[#allocation5 + $0x5c] sm:$0xf]
    %v171 = vld [vmem:[#allocation5 + $0x60] sm:$0xf]
    %v172 = vld [vmem:[#allocation5 + $0x64] sm:$0xf]
    %v173 = vld [vmem:[#allocation5 + $0x68] sm:$0xf]
    %v174 = vld [vmem:[#allocation5 + $0x6c] sm:$0xf]
    %v175 = vld [vmem:[#allocation5 + $0x70] sm:$0xf]
    %v176 = vld [vmem:[#allocation5 + $0x74] sm:$0xf]
    %v177 = vld [vmem:[#allocation5 + $0x78] sm:$0xf]
    %v178 = vld [vmem:[#allocation5 + $0x7c] sm:$0xf]
    %v179 = vld [vmem:[#allocation5 + $0x80] sm:$0xf]
    %v180 = vld [vmem:[#allocation5 + $0x84] sm:$0xf]
    %v181 = vld [vmem:[#allocation5 + $0x88] sm:$0xf]
    %v182 = vld [vmem:[#allocation5 + $0x8c] sm:$0xf]
    %v183 = vld [vmem:[#allocation5 + $0x90] sm:$0xf]
    %v184 = vld [vmem:[#allocation5 + $0x94] sm:$0xf]
    %v185 = vld [vmem:[#allocation5 + $0x98] sm:$0xf]
    %v186 = vld [vmem:[#allocation5 + $0x9c] sm:$0xf]
    %v187 = vld [vmem:[#allocation5 + $0xa0] sm:$0xf]
    %v188 = vld [vmem:[#allocation5 + $0xa4] sm:$0xf]
    %v189 = vld [vmem:[#allocation5 + $0xa8] sm:$0xf]
    %v190 = vld [vmem:[#allocation5 + $0xac] sm:$0xf]
    %v191 = vld [vmem:[#allocation5 + $0xb0] sm:$0xf]
    %v192 = vld [vmem:[#allocation5 + $0xb4] sm:$0xf]
    %v193 = vld [vmem:[#allocation5 + $0xb8] sm:$0xf]
    %v194 = vld [vmem:[#allocation5 + $0xbc] sm:$0xf]
    %v195 = vld [vmem:[#allocation5 + $0xc0] sm:$0xf]
    %v196 = vld [vmem:[#allocation5 + $0xc4] sm:$0xf]
    %v197 = vld [vmem:[#allocation5 + $0xc8] sm:$0xf]
    %v198 = vld [vmem:[#allocation5 + $0xcc] sm:$0xf]
    %v199 = vld [vmem:[#allocation5 + $0xd0] sm:$0xf]
    %v200 = vld [vmem:[#allocation5 + $0xd4] sm:$0xf]
    %v201 = vld [vmem:[#allocation5 + $0xd8] sm:$0xf]
    %v202 = vld [vmem:[#allocation5 + $0xdc] sm:$0xf]
    %v203 = vld [vmem:[#allocation5 + $0xe0] sm:$0xf]
    %v204 = vld [vmem:[#allocation5 + $0xe4] sm:$0xf]
    %v205 = vld [vmem:[#allocation5 + $0xe8] sm:$0xf]
    %v206 = vld [vmem:[#allocation5 + $0xec] sm:$0xf]
    %v207 = vld [vmem:[#allocation5 + $0xf0] sm:$0xf]
    %v208 = vld [vmem:[#allocation5 + $0xf4] sm:$0xf]
    %v209 = vld [vmem:[#allocation5 + $0xf8] sm:$0xf]
    %v210 = vld [vmem:[#allocation5 + $0xfc] sm:$0xf]
    %v211 = vld [vmem:[#allocation5 + $0x100] sm:$0xf]
    %v212 = vld [vmem:[#allocation5 + $0x104] sm:$0xf]
    %v213 = vld [vmem:[#allocation5 + $0x108] sm:$0xf]
    %v214 = vld [vmem:[#allocation5 + $0x10c] sm:$0xf]
    %v215 = vld [vmem:[#allocation5 + $0x110] sm:$0xf]
    %v216 = vld [vmem:[#allocation5 + $0x114] sm:$0xf]
    %v217 = vld [vmem:[#allocation5 + $0x118] sm:$0xf]
    %v218 = vld [vmem:[#allocation5 + $0x11c] sm:$0xf]
    %v219 = vld [vmem:[#allocation5 + $0x120] sm:$0xf]
    %v220 = vld [vmem:[#allocation5 + $0x124] sm:$0xf]
    %v221 = vld [vmem:[#allocation5 + $0x128] sm:$0xf]
    %v222 = vld [vmem:[#allocation5 + $0x12c] sm:$0xf]
    %v223 = vld [vmem:[#allocation5 + $0x130] sm:$0xf]
    %v224 = vld [vmem:[#allocation5 + $0x134] sm:$0xf]
    %v225 = vld [vmem:[#allocation5 + $0x138] sm:$0xf]
    %v226 = vld [vmem:[#allocation5 + $0x13c] sm:$0xf]
    %v227 = vld [vmem:[#allocation5 + $0x140] sm:$0xf]
    %v228 = vld [vmem:[#allocation5 + $0x144] sm:$0xf]
    %v229 = vld [vmem:[#allocation5 + $0x148] sm:$0xf]
    %v230 = vld [vmem:[#allocation5 + $0x14c] sm:$0xf]
    %v231 = vld [vmem:[#allocation5 + $0x150] sm:$0xf]
    %v232 = vld [vmem:[#allocation5 + $0x154] sm:$0xf]
    %v233 = vld [vmem:[#allocation5 + $0x158] sm:$0xf]
    %v234 = vld [vmem:[#allocation5 + $0x15c] sm:$0xf]
    %v235 = vld [vmem:[#allocation5 + $0x160] sm:$0xf]
    %v236 = vld [vmem:[#allocation5 + $0x164] sm:$0xf]
    %v237 = vld [vmem:[#allocation5 + $0x168] sm:$0xf]
    %v238 = vld [vmem:[#allocation5 + $0x16c] sm:$0xf]
    %v239 = vld [vmem:[#allocation5 + $0x170] sm:$0xf]
    %v240 = vld [vmem:[#allocation5 + $0x174] sm:$0xf]
    %v241 = vld [vmem:[#allocation5 + $0x178] sm:$0xf]
    %v242 = vld [vmem:[#allocation5 + $0x17c] sm:$0xf]
    %v243 = vld [vmem:[#allocation5 + $0x180] sm:$0xf]
    %v244 = vld [vmem:[#allocation5 + $0x184] sm:$0xf]
    %v245 = vld [vmem:[#allocation5 + $0x188] sm:$0xf]
    %v246 = vld [vmem:[#allocation5 + $0x18c] sm:$0xf]
    %v247 = vld [vmem:[#allocation5 + $0x190] sm:$0xf]
    %v248 = vld [vmem:[#allocation5 + $0x194] sm:$0xf]
    %v249 = vld [vmem:[#allocation5 + $0x198] sm:$0xf]
    %v250 = vld [vmem:[#allocation5 + $0x19c] sm:$0xf]
    %v251 = vld [vmem:[#allocation5 + $0x1a0] sm:$0xf]
    %v252 = vld [vmem:[#allocation5 + $0x1a4] sm:$0xf]
    %v253 = vld [vmem:[#allocation5 + $0x1a8] sm:$0xf]
    %v254 = vld [vmem:[#allocation5 + $0x1ac] sm:$0xf]
    %v255 = vld [vmem:[#allocation5 + $0x1b0] sm:$0xf]
    %v256 = vld [vmem:[#allocation5 + $0x1b4] sm:$0xf]
    %v257 = vld [vmem:[#allocation5 + $0x1b8] sm:$0xf]
    %v258 = vld [vmem:[#allocation5 + $0x1bc] sm:$0xf]
    %v259 = vld [vmem:[%s2] sm:$0x1]
    %v261 = vlaneseq
    %v262 = vshrl.u32 %v261, 7
    %v263 = vsub.s32 0, %v262
    %v264 = vrot.slane %v259, %v263
    %v330 = vunpack.c.l.b16 %v83
    %v331 = vunpack.c.h.b16 %v83
    %v332 = vunpack.c.l.b16 %v84
    %v333 = vunpack.c.h.b16 %v84
    %v334 = vunpack.c.l.b16 %v85
    %v335 = vunpack.c.h.b16 %v85
    %v336 = vunpack.c.l.b16 %v86
    %v337 = vunpack.c.l.b16 %v87
    %v338 = vunpack.c.h.b16 %v87
    %v339 = vunpack.c.l.b16 %v88
    %v340 = vunpack.c.h.b16 %v88
    %v341 = vunpack.c.l.b16 %v89
    %v342 = vunpack.c.h.b16 %v89
    %v343 = vunpack.c.l.b16 %v90
    %v344 = vunpack.c.l.b16 %v91
    %v345 = vunpack.c.h.b16 %v91
    %v346 = vunpack.c.l.b16 %v92
    %v347 = vunpack.c.h.b16 %v92
    %v348 = vunpack.c.l.b16 %v93
    %v349 = vunpack.c.h.b16 %v93
    %v350 = vunpack.c.l.b16 %v94
    %v351 = vunpack.c.l.b16 %v95
    %v352 = vunpack.c.h.b16 %v95
    %v353 = vunpack.c.l.b16 %v96
    %v354 = vunpack.c.h.b16 %v96
    %v355 = vunpack.c.l.b16 %v97
    %v356 = vunpack.c.h.b16 %v97
    %v357 = vunpack.c.l.b16 %v98
    %v358 = vunpack.c.l.b16 %v99
    %v359 = vunpack.c.h.b16 %v99
    %v360 = vunpack.c.l.b16 %v100
    %v361 = vunpack.c.h.b16 %v100
    %v362 = vunpack.c.l.b16 %v101
    %v363 = vunpack.c.h.b16 %v101
    %v364 = vunpack.c.l.b16 %v102
    %v365 = vunpack.c.l.b16 %v103
    %v366 = vunpack.c.h.b16 %v103
    %v367 = vunpack.c.l.b16 %v104
    %v368 = vunpack.c.h.b16 %v104
    %v369 = vunpack.c.l.b16 %v105
    %v370 = vunpack.c.h.b16 %v105
    %v371 = vunpack.c.l.b16 %v106
    %v372 = vunpack.c.l.b16 %v107
    %v373 = vunpack.c.h.b16 %v107
    %v374 = vunpack.c.l.b16 %v108
    %v375 = vunpack.c.h.b16 %v108
    %v376 = vunpack.c.l.b16 %v109
    %v377 = vunpack.c.h.b16 %v109
    %v378 = vunpack.c.l.b16 %v110
    %v379 = vunpack.c.l.b16 %v111
    %v380 = vunpack.c.h.b16 %v111
    %v381 = vunpack.c.l.b16 %v112
    %v382 = vunpack.c.h.b16 %v112
    %v383 = vunpack.c.l.b16 %v113
    %v384 = vunpack.c.h.b16 %v113
    %v385 = vunpack.c.l.b16 %v114
    %v386 = vunpack.c.l.b16 %v115
    %v387 = vunpack.c.h.b16 %v115
    %v388 = vunpack.c.l.b16 %v116
    %v389 = vunpack.c.h.b16 %v116
    %v390 = vunpack.c.l.b16 %v117
    %v391 = vunpack.c.h.b16 %v117
    %v392 = vunpack.c.l.b16 %v118
    %v393 = vunpack.c.l.b16 %v119
    %v394 = vunpack.c.h.b16 %v119
    %v395 = vunpack.c.l.b16 %v120
    %v396 = vunpack.c.h.b16 %v120
    %v397 = vunpack.c.l.b16 %v121
    %v398 = vunpack.c.h.b16 %v121
    %v399 = vunpack.c.l.b16 %v122
    %v400 = vunpack.c.l.b16 %v123
    %v401 = vunpack.c.h.b16 %v123
    %v402 = vunpack.c.l.b16 %v124
    %v403 = vunpack.c.h.b16 %v124
    %v404 = vunpack.c.l.b16 %v125
    %v405 = vunpack.c.h.b16 %v125
    %v406 = vunpack.c.l.b16 %v126
    %v407 = vunpack.c.l.b16 %v127
    %v408 = vunpack.c.h.b16 %v127
    %v409 = vunpack.c.l.b16 %v128
    %v410 = vunpack.c.h.b16 %v128
    %v411 = vunpack.c.l.b16 %v129
    %v412 = vunpack.c.h.b16 %v129
    %v413 = vunpack.c.l.b16 %v130
    %v414 = vunpack.c.l.b16 %v131
    %v415 = vunpack.c.h.b16 %v131
    %v416 = vunpack.c.l.b16 %v132
    %v417 = vunpack.c.h.b16 %v132
    %v418 = vunpack.c.l.b16 %v133
    %v419 = vunpack.c.h.b16 %v133
    %v420 = vunpack.c.l.b16 %v134
    %v421 = vunpack.c.l.b16 %v135
    %v422 = vunpack.c.h.b16 %v135
    %v423 = vunpack.c.l.b16 %v136
    %v424 = vunpack.c.h.b16 %v136
    %v425 = vunpack.c.l.b16 %v137
    %v426 = vunpack.c.h.b16 %v137
    %v427 = vunpack.c.l.b16 %v138
    %v428 = vunpack.c.l.b16 %v139
    %v429 = vunpack.c.h.b16 %v139
    %v430 = vunpack.c.l.b16 %v140
    %v431 = vunpack.c.h.b16 %v140
    %v432 = vunpack.c.l.b16 %v141
    %v433 = vunpack.c.h.b16 %v141
    %v434 = vunpack.c.l.b16 %v142
    %v435 = vunpack.c.l.b16 %v143
    %v436 = vunpack.c.h.b16 %v143
    %v437 = vunpack.c.l.b16 %v144
    %v438 = vunpack.c.h.b16 %v144
    %v439 = vunpack.c.l.b16 %v145
    %v440 = vunpack.c.h.b16 %v145
    %v441 = vunpack.c.l.b16 %v146
    %v442 = vpack.c.b16 %v337, %v330
    %v443 = vpack.c.b16 %v338, %v331
    %v444 = vpack.c.b16 %v339, %v332
    %v445 = vpack.c.b16 %v340, %v333
    %v446 = vpack.c.b16 %v341, %v334
    %v447 = vpack.c.b16 %v342, %v335
    %v448 = vpack.c.b16 %v343, %v336
    %v449 = vpack.c.b16 %v351, %v344
    %v450 = vpack.c.b16 %v352, %v345
    %v451 = vpack.c.b16 %v353, %v346
    %v452 = vpack.c.b16 %v354, %v347
    %v453 = vpack.c.b16 %v355, %v348
    %v454 = vpack.c.b16 %v356, %v349
    %v455 = vpack.c.b16 %v357, %v350
    %v456 = vpack.c.b16 %v365, %v358
    %v457 = vpack.c.b16 %v366, %v359
    %v458 = vpack.c.b16 %v367, %v360
    %v459 = vpack.c.b16 %v368, %v361
    %v460 = vpack.c.b16 %v369, %v362
    %v461 = vpack.c.b16 %v370, %v363
    %v462 = vpack.c.b16 %v371, %v364
    %v463 = vpack.c.b16 %v379, %v372
    %v464 = vpack.c.b16 %v380, %v373
    %v465 = vpack.c.b16 %v381, %v374
    %v466 = vpack.c.b16 %v382, %v375
    %v467 = vpack.c.b16 %v383, %v376
    %v468 = vpack.c.b16 %v384, %v377
    %v469 = vpack.c.b16 %v385, %v378
    %v470 = vpack.c.b16 %v393, %v386
    %v471 = vpack.c.b16 %v394, %v387
    %v472 = vpack.c.b16 %v395, %v388
    %v473 = vpack.c.b16 %v396, %v389
    %v474 = vpack.c.b16 %v397, %v390
    %v475 = vpack.c.b16 %v398, %v391
    %v476 = vpack.c.b16 %v399, %v392
    %v477 = vpack.c.b16 %v407, %v400
    %v478 = vpack.c.b16 %v408, %v401
    %v479 = vpack.c.b16 %v409, %v402
    %v480 = vpack.c.b16 %v410, %v403
    %v481 = vpack.c.b16 %v411, %v404
    %v482 = vpack.c.b16 %v412, %v405
    %v483 = vpack.c.b16 %v413, %v406
    %v484 = vpack.c.b16 %v421, %v414
    %v485 = vpack.c.b16 %v422, %v415
    %v486 = vpack.c.b16 %v423, %v416
    %v487 = vpack.c.b16 %v424, %v417
    %v488 = vpack.c.b16 %v425, %v418
    %v489 = vpack.c.b16 %v426, %v419
    %v490 = vpack.c.b16 %v427, %v420
    %v491 = vpack.c.b16 %v435, %v428
    %v492 = vpack.c.b16 %v436, %v429
    %v493 = vpack.c.b16 %v437, %v430
    %v494 = vpack.c.b16 %v438, %v431
    %v495 = vpack.c.b16 %v439, %v432
    %v496 = vpack.c.b16 %v440, %v433
    %v497 = vpack.c.b16 %v441, %v434
    %v666 = vunpack.c.l.b16 %v147
    %v667 = vunpack.c.l.b16 %v148
    %v668 = vunpack.c.l.b16 %v149
    %v669 = vunpack.c.l.b16 %v150
    %v670 = vunpack.c.l.b16 %v151
    %v671 = vunpack.c.l.b16 %v152
    %v672 = vunpack.c.l.b16 %v153
    %v673 = vunpack.c.l.b16 %v154
    %v674 = vunpack.c.l.b16 %v155
    %v675 = vunpack.c.l.b16 %v156
    %v676 = vunpack.c.l.b16 %v157
    %v677 = vunpack.c.l.b16 %v158
    %v678 = vunpack.c.l.b16 %v159
    %v679 = vunpack.c.l.b16 %v160
    %v680 = vunpack.c.l.b16 %v161
    %v681 = vunpack.c.l.b16 %v162
    %v682 = vunpack.c.l.b16 %v163
    %v683 = vunpack.c.l.b16 %v164
    %v684 = vunpack.c.l.b16 %v165
    %v685 = vunpack.c.l.b16 %v166
    %v686 = vunpack.c.l.b16 %v167
    %v687 = vunpack.c.l.b16 %v168
    %v688 = vunpack.c.l.b16 %v169
    %v689 = vunpack.c.l.b16 %v170
    %v690 = vunpack.c.l.b16 %v171
    %v691 = vunpack.c.l.b16 %v172
    %v692 = vunpack.c.l.b16 %v173
    %v693 = vunpack.c.l.b16 %v174
    %v694 = vunpack.c.l.b16 %v175
    %v695 = vunpack.c.l.b16 %v176
    %v696 = vunpack.c.l.b16 %v177
    %v697 = vunpack.c.l.b16 %v178
    %v698 = vunpack.c.l.b16 %v179
    %v699 = vunpack.c.l.b16 %v180
    %v700 = vunpack.c.l.b16 %v181
    %v701 = vunpack.c.l.b16 %v182
    %v702 = vunpack.c.l.b16 %v183
    %v703 = vunpack.c.l.b16 %v184
    %v704 = vunpack.c.l.b16 %v185
    %v705 = vunpack.c.l.b16 %v186
    %v706 = vunpack.c.l.b16 %v187
    %v707 = vunpack.c.l.b16 %v188
    %v708 = vunpack.c.l.b16 %v189
    %v709 = vunpack.c.l.b16 %v190
    %v710 = vunpack.c.l.b16 %v191
    %v711 = vunpack.c.l.b16 %v192
    %v712 = vunpack.c.l.b16 %v193
    %v713 = vunpack.c.l.b16 %v194
    %v714 = vunpack.c.l.b16 %v195
    %v715 = vunpack.c.l.b16 %v196
    %v716 = vunpack.c.l.b16 %v197
    %v717 = vunpack.c.l.b16 %v198
    %v718 = vunpack.c.l.b16 %v199
    %v719 = vunpack.c.l.b16 %v200
    %v720 = vunpack.c.l.b16 %v201
    %v721 = vunpack.c.l.b16 %v202
    %v722 = vunpack.c.l.b16 %v203
    %v723 = vunpack.c.l.b16 %v204
    %v724 = vunpack.c.l.b16 %v205
    %v725 = vunpack.c.l.b16 %v206
    %v726 = vunpack.c.l.b16 %v207
    %v727 = vunpack.c.l.b16 %v208
    %v728 = vunpack.c.l.b16 %v209
    %v729 = vunpack.c.l.b16 %v210
    %v730 = vunpack.c.l.b16 %v211
    %v731 = vunpack.c.l.b16 %v212
    %v732 = vunpack.c.l.b16 %v213
    %v733 = vunpack.c.l.b16 %v214
    %v734 = vunpack.c.l.b16 %v215
    %v735 = vunpack.c.l.b16 %v216
    %v736 = vunpack.c.l.b16 %v217
    %v737 = vunpack.c.l.b16 %v218
    %v738 = vunpack.c.l.b16 %v219
    %v739 = vunpack.c.l.b16 %v220
    %v740 = vunpack.c.l.b16 %v221
    %v741 = vunpack.c.l.b16 %v222
    %v742 = vunpack.c.l.b16 %v223
    %v743 = vunpack.c.l.b16 %v224
    %v744 = vunpack.c.l.b16 %v225
    %v745 = vunpack.c.l.b16 %v226
    %v746 = vunpack.c.l.b16 %v227
    %v747 = vunpack.c.l.b16 %v228
    %v748 = vunpack.c.l.b16 %v229
    %v749 = vunpack.c.l.b16 %v230
    %v750 = vunpack.c.l.b16 %v231
    %v751 = vunpack.c.l.b16 %v232
    %v752 = vunpack.c.l.b16 %v233
    %v753 = vunpack.c.l.b16 %v234
    %v754 = vunpack.c.l.b16 %v235
    %v755 = vunpack.c.l.b16 %v236
    %v756 = vunpack.c.l.b16 %v237
    %v757 = vunpack.c.l.b16 %v238
    %v758 = vunpack.c.l.b16 %v239
    %v759 = vunpack.c.l.b16 %v240
    %v760 = vunpack.c.l.b16 %v241
    %v761 = vunpack.c.l.b16 %v242
    %v762 = vunpack.c.l.b16 %v243
    %v763 = vunpack.c.l.b16 %v244
    %v764 = vunpack.c.l.b16 %v245
    %v765 = vunpack.c.l.b16 %v246
    %v766 = vunpack.c.l.b16 %v247
    %v767 = vunpack.c.l.b16 %v248
    %v768 = vunpack.c.l.b16 %v249
    %v769 = vunpack.c.l.b16 %v250
    %v770 = vunpack.c.l.b16 %v251
    %v771 = vunpack.c.l.b16 %v252
    %v772 = vunpack.c.l.b16 %v253
    %v773 = vunpack.c.l.b16 %v254
    %v774 = vunpack.c.l.b16 %v255
    %v775 = vunpack.c.l.b16 %v256
    %v776 = vunpack.c.l.b16 %v257
    %v777 = vunpack.c.l.b16 %v258
    %v778 = vpack.c.b16 %v667, %v666
    %v779 = vpack.c.b16 %v669, %v668
    %v780 = vpack.c.b16 %v671, %v670
    %v781 = vpack.c.b16 %v673, %v672
    %v782 = vpack.c.b16 %v675, %v674
    %v783 = vpack.c.b16 %v677, %v676
    %v784 = vpack.c.b16 %v679, %v678
    %v785 = vpack.c.b16 %v681, %v680
    %v786 = vpack.c.b16 %v683, %v682
    %v787 = vpack.c.b16 %v685, %v684
    %v788 = vpack.c.b16 %v687, %v686
    %v789 = vpack.c.b16 %v689, %v688
    %v790 = vpack.c.b16 %v691, %v690
    %v791 = vpack.c.b16 %v693, %v692
    %v792 = vpack.c.b16 %v695, %v694
    %v793 = vpack.c.b16 %v697, %v696
    %v794 = vpack.c.b16 %v699, %v698
    %v795 = vpack.c.b16 %v701, %v700
    %v796 = vpack.c.b16 %v703, %v702
    %v797 = vpack.c.b16 %v705, %v704
    %v798 = vpack.c.b16 %v707, %v706
    %v799 = vpack.c.b16 %v709, %v708
    %v800 = vpack.c.b16 %v711, %v710
    %v801 = vpack.c.b16 %v713, %v712
    %v802 = vpack.c.b16 %v715, %v714
    %v803 = vpack.c.b16 %v717, %v716
    %v804 = vpack.c.b16 %v719, %v718
    %v805 = vpack.c.b16 %v721, %v720
    %v806 = vpack.c.b16 %v723, %v722
    %v807 = vpack.c.b16 %v725, %v724
    %v808 = vpack.c.b16 %v727, %v726
    %v809 = vpack.c.b16 %v729, %v728
    %v810 = vpack.c.b16 %v731, %v730
    %v811 = vpack.c.b16 %v733, %v732
    %v812 = vpack.c.b16 %v735, %v734
    %v813 = vpack.c.b16 %v737, %v736
    %v814 = vpack.c.b16 %v739, %v738
    %v815 = vpack.c.b16 %v741, %v740
    %v816 = vpack.c.b16 %v743, %v742
    %v817 = vpack.c.b16 %v745, %v744
    %v818 = vpack.c.b16 %v747, %v746
    %v819 = vpack.c.b16 %v749, %v748
    %v820 = vpack.c.b16 %v751, %v750
    %v821 = vpack.c.b16 %v753, %v752
    %v822 = vpack.c.b16 %v755, %v754
    %v823 = vpack.c.b16 %v757, %v756
    %v824 = vpack.c.b16 %v759, %v758
    %v825 = vpack.c.b16 %v761, %v760
    %v826 = vpack.c.b16 %v763, %v762
    %v827 = vpack.c.b16 %v765, %v764
    %v828 = vpack.c.b16 %v767, %v766
    %v829 = vpack.c.b16 %v769, %v768
    %v830 = vpack.c.b16 %v771, %v770
    %v831 = vpack.c.b16 %v773, %v772
    %v832 = vpack.c.b16 %v775, %v774
    %v833 = vpack.c.b16 %v777, %v776
    %890 = vmatprep.subr.bf16.mxu0 0
    %891 = vmatpush1.bf16.msra.mxu0 %v785
    %892 = vmatprep.subr.bf16.mxu0 0
    %893 = vmatpush1.bf16.msra.mxu0 %v784
    %894 = vmatprep.subr.bf16.mxu0 0
    %895 = vmatpush1.bf16.msra.mxu0 %v783
    %896 = vmatprep.subr.bf16.mxu0 0
    %897 = vmatpush1.bf16.msra.mxu0 %v782
    %898 = vmatprep.subr.bf16.mxu0 0
    %899 = vmatpush1.bf16.msra.mxu0 %v781
    %900 = vmatprep.subr.bf16.mxu0 0
    %901 = vmatpush1.bf16.msra.mxu0 %v780
    %902 = vmatprep.subr.bf16.mxu0 0
    %903 = vmatpush1.bf16.msra.mxu0 %v779
    %904 = vmatprep.subr.bf16.mxu0 0
    %905 = vmatpush1.bf16.msra.mxu0 %v778
    %906 = vmatprep.subr.bf16.mxu0 0
    %907 = vmatpush2.bf16.msra.mxu0 %v793
    %908 = vmatprep.subr.bf16.mxu0 0
    %909 = vmatpush2.bf16.msra.mxu0 %v792
    %910 = vmatprep.subr.bf16.mxu0 0
    %911 = vmatpush2.bf16.msra.mxu0 %v791
    %912 = vmatprep.subr.bf16.mxu0 0
    %913 = vmatpush2.bf16.msra.mxu0 %v790
    %914 = vmatprep.subr.bf16.mxu0 0
    %915 = vmatpush2.bf16.msra.mxu0 %v789
    %916 = vmatprep.subr.bf16.mxu0 0
    %917 = vmatpush2.bf16.msra.mxu0 %v788
    %918 = vmatprep.subr.bf16.mxu0 0
    %919 = vmatpush2.bf16.msra.mxu0 %v787
    %920 = vmatprep.subr.bf16.mxu0 0
    %921 = vmatpush2.bf16.msra.mxu0 %v786
    %922 = vmatprep.mubr.bf16.mxu0 %v443
    %923 = vmatmul.mubr.bf16.gmra.mxu0 %v442
    %v924 = vpop.f32.mrf.mxu0
    %v925 = vadd.f32 %v264, %v924
    %v926 = vpop.f32.mrf.mxu0
    %v927 = vpop.f32.mrf.mxu0
    %v928 = vadd.f32 %v264, %v927
    %v929 = vpop.f32.mrf.mxu0
    %930 = vmatprep.mubr.bf16.mxu0 %v450
    %931 = vmatmul.mubr.bf16.gmra.mxu0 %v449
    %v932 = vpop.f32.mrf.mxu0
    %v933 = vadd.f32 %v264, %v932
    %v934 = vpop.f32.mrf.mxu0
    %v935 = vpop.f32.mrf.mxu0
    %v936 = vadd.f32 %v264, %v935
    %v937 = vpop.f32.mrf.mxu0
    %938 = vmatprep.mubr.bf16.mxu0 %v457
    %939 = vmatmul.mubr.bf16.gmra.mxu0 %v456
    %v940 = vpop.f32.mrf.mxu0
    %v941 = vadd.f32 %v264, %v940
    %v942 = vpop.f32.mrf.mxu0
    %v943 = vpop.f32.mrf.mxu0
    %v944 = vadd.f32 %v264, %v943
    %v945 = vpop.f32.mrf.mxu0
    %946 = vmatprep.mubr.bf16.mxu0 %v464
    %947 = vmatmul.mubr.bf16.gmra.mxu0 %v463
    %v948 = vpop.f32.mrf.mxu0
    %v949 = vadd.f32 %v264, %v948
    %v950 = vpop.f32.mrf.mxu0
    %v951 = vpop.f32.mrf.mxu0
    %v952 = vadd.f32 %v264, %v951
    %v953 = vpop.f32.mrf.mxu0
    %954 = vmatprep.mubr.bf16.mxu0 %v471
    %955 = vmatmul.mubr.bf16.gmra.mxu0 %v470
    %v956 = vpop.f32.mrf.mxu0
    %v957 = vadd.f32 %v264, %v956
    %v958 = vpop.f32.mrf.mxu0
    %v959 = vpop.f32.mrf.mxu0
    %v960 = vadd.f32 %v264, %v959
    %v961 = vpop.f32.mrf.mxu0
    %962 = vmatprep.mubr.bf16.mxu0 %v478
    %963 = vmatmul.mubr.bf16.gmra.mxu0 %v477
    %v964 = vpop.f32.mrf.mxu0
    %v965 = vadd.f32 %v264, %v964
    %v966 = vpop.f32.mrf.mxu0
    %v967 = vpop.f32.mrf.mxu0
    %v968 = vadd.f32 %v264, %v967
    %v969 = vpop.f32.mrf.mxu0
    %970 = vmatprep.mubr.bf16.mxu0 %v485
    %971 = vmatmul.mubr.bf16.gmra.mxu0 %v484
    %v972 = vpop.f32.mrf.mxu0
    %v973 = vadd.f32 %v264, %v972
    %v974 = vpop.f32.mrf.mxu0
    %v975 = vpop.f32.mrf.mxu0
    %v976 = vadd.f32 %v264, %v975
    %v977 = vpop.f32.mrf.mxu0
    %978 = vmatprep.mubr.bf16.mxu0 %v492
    %979 = vmatmul.mubr.bf16.gmra.mxu0 %v491
    %v980 = vpop.f32.mrf.mxu0
    %v981 = vadd.f32 %v264, %v980
    %v982 = vpop.f32.mrf.mxu0
    %v983 = vpop.f32.mrf.mxu0
    %v984 = vadd.f32 %v264, %v983
    %v985 = vpop.f32.mrf.mxu0
    %986 = vdwg.mxu0
    %987 = vmatprep.subr.bf16.mxu0 0
    %988 = vmatpush1.bf16.msra.mxu0 %v801
    %989 = vmatprep.subr.bf16.mxu0 0
    %990 = vmatpush1.bf16.msra.mxu0 %v800
    %991 = vmatprep.subr.bf16.mxu0 0
    %992 = vmatpush1.bf16.msra.mxu0 %v799
    %993 = vmatprep.subr.bf16.mxu0 0
    %994 = vmatpush1.bf16.msra.mxu0 %v798
    %995 = vmatprep.subr.bf16.mxu0 0
    %996 = vmatpush1.bf16.msra.mxu0 %v797
    %997 = vmatprep.subr.bf16.mxu0 0
    %998 = vmatpush1.bf16.msra.mxu0 %v796
    %999 = vmatprep.subr.bf16.mxu0 0
    %1000 = vmatpush1.bf16.msra.mxu0 %v795
    %1001 = vmatprep.subr.bf16.mxu0 0
    %1002 = vmatpush1.bf16.msra.mxu0 %v794
    %1003 = vmatprep.subr.bf16.mxu0 0
    %1004 = vmatpush2.bf16.msra.mxu0 %v809
    %1005 = vmatprep.subr.bf16.mxu0 0
    %1006 = vmatpush2.bf16.msra.mxu0 %v808
    %1007 = vmatprep.subr.bf16.mxu0 0
    %1008 = vmatpush2.bf16.msra.mxu0 %v807
    %1009 = vmatprep.subr.bf16.mxu0 0
    %1010 = vmatpush2.bf16.msra.mxu0 %v806
    %1011 = vmatprep.subr.bf16.mxu0 0
    %1012 = vmatpush2.bf16.msra.mxu0 %v805
    %1013 = vmatprep.subr.bf16.mxu0 0
    %1014 = vmatpush2.bf16.msra.mxu0 %v804
    %1015 = vmatprep.subr.bf16.mxu0 0
    %1016 = vmatpush2.bf16.msra.mxu0 %v803
    %1017 = vmatprep.subr.bf16.mxu0 0
    %1018 = vmatpush2.bf16.msra.mxu0 %v802
    %1019 = vmatprep.mubr.bf16.mxu0 %v445
    %1020 = vmatmul.mubr.bf16.gmra.mxu0 %v444
    %v1021 = vpop.f32.mrf.mxu0
    %v1022 = vadd.f32 %v925, %v1021
    %v1023 = vpop.f32.mrf.mxu0
    %v1024 = vpop.f32.mrf.mxu0
    %v1025 = vadd.f32 %v928, %v1024
    %v1026 = vpop.f32.mrf.mxu0
    %1027 = vmatprep.mubr.bf16.mxu0 %v452
    %1028 = vmatmul.mubr.bf16.gmra.mxu0 %v451
    %v1029 = vpop.f32.mrf.mxu0
    %v1030 = vadd.f32 %v933, %v1029
    %v1031 = vpop.f32.mrf.mxu0
    %v1032 = vpop.f32.mrf.mxu0
    %v1033 = vadd.f32 %v936, %v1032
    %v1034 = vpop.f32.mrf.mxu0
    %1035 = vmatprep.mubr.bf16.mxu0 %v459
    %1036 = vmatmul.mubr.bf16.gmra.mxu0 %v458
    %v1037 = vpop.f32.mrf.mxu0
    %v1038 = vadd.f32 %v941, %v1037
    %v1039 = vpop.f32.mrf.mxu0
    %v1040 = vpop.f32.mrf.mxu0
    %v1041 = vadd.f32 %v944, %v1040
    %v1042 = vpop.f32.mrf.mxu0
    %1043 = vmatprep.mubr.bf16.mxu0 %v466
    %1044 = vmatmul.mubr.bf16.gmra.mxu0 %v465
    %v1045 = vpop.f32.mrf.mxu0
    %v1046 = vadd.f32 %v949, %v1045
    %v1047 = vpop.f32.mrf.mxu0
    %v1048 = vpop.f32.mrf.mxu0
    %v1049 = vadd.f32 %v952, %v1048
    %v1050 = vpop.f32.mrf.mxu0
    %1051 = vmatprep.mubr.bf16.mxu0 %v473
    %1052 = vmatmul.mubr.bf16.gmra.mxu0 %v472
    %v1053 = vpop.f32.mrf.mxu0
    %v1054 = vadd.f32 %v957, %v1053
    %v1055 = vpop.f32.mrf.mxu0
    %v1056 = vpop.f32.mrf.mxu0
    %v1057 = vadd.f32 %v960, %v1056
    %v1058 = vpop.f32.mrf.mxu0
    %1059 = vmatprep.mubr.bf16.mxu0 %v480
    %1060 = vmatmul.mubr.bf16.gmra.mxu0 %v479
    %v1061 = vpop.f32.mrf.mxu0
    %v1062 = vadd.f32 %v965, %v1061
    %v1063 = vpop.f32.mrf.mxu0
    %v1064 = vpop.f32.mrf.mxu0
    %v1065 = vadd.f32 %v968, %v1064
    %v1066 = vpop.f32.mrf.mxu0
    %1067 = vmatprep.mubr.bf16.mxu0 %v487
    %1068 = vmatmul.mubr.bf16.gmra.mxu0 %v486
    %v1069 = vpop.f32.mrf.mxu0
    %v1070 = vadd.f32 %v973, %v1069
    %v1071 = vpop.f32.mrf.mxu0
    %v1072 = vpop.f32.mrf.mxu0
    %v1073 = vadd.f32 %v976, %v1072
    %v1074 = vpop.f32.mrf.mxu0
    %1075 = vmatprep.mubr.bf16.mxu0 %v494
    %1076 = vmatmul.mubr.bf16.gmra.mxu0 %v493
    %v1077 = vpop.f32.mrf.mxu0
    %v1078 = vadd.f32 %v981, %v1077
    %v1079 = vpop.f32.mrf.mxu0
    %v1080 = vpop.f32.mrf.mxu0
    %v1081 = vadd.f32 %v984, %v1080
    %v1082 = vpop.f32.mrf.mxu0
    %1083 = vdwg.mxu0
    %1084 = vmatprep.subr.bf16.mxu0 0
    %1085 = vmatpush1.bf16.msra.mxu0 %v817
    %1086 = vmatprep.subr.bf16.mxu0 0
    %1087 = vmatpush1.bf16.msra.mxu0 %v816
    %1088 = vmatprep.subr.bf16.mxu0 0
    %1089 = vmatpush1.bf16.msra.mxu0 %v815
    %1090 = vmatprep.subr.bf16.mxu0 0
    %1091 = vmatpush1.bf16.msra.mxu0 %v814
    %1092 = vmatprep.subr.bf16.mxu0 0
    %1093 = vmatpush1.bf16.msra.mxu0 %v813
    %1094 = vmatprep.subr.bf16.mxu0 0
    %1095 = vmatpush1.bf16.msra.mxu0 %v812
    %1096 = vmatprep.subr.bf16.mxu0 0
    %1097 = vmatpush1.bf16.msra.mxu0 %v811
    %1098 = vmatprep.subr.bf16.mxu0 0
    %1099 = vmatpush1.bf16.msra.mxu0 %v810
    %1100 = vmatprep.subr.bf16.mxu0 0
    %1101 = vmatpush2.bf16.msra.mxu0 %v825
    %1102 = vmatprep.subr.bf16.mxu0 0
    %1103 = vmatpush2.bf16.msra.mxu0 %v824
    %1104 = vmatprep.subr.bf16.mxu0 0
    %1105 = vmatpush2.bf16.msra.mxu0 %v823
    %1106 = vmatprep.subr.bf16.mxu0 0
    %1107 = vmatpush2.bf16.msra.mxu0 %v822
    %1108 = vmatprep.subr.bf16.mxu0 0
    %1109 = vmatpush2.bf16.msra.mxu0 %v821
    %1110 = vmatprep.subr.bf16.mxu0 0
    %1111 = vmatpush2.bf16.msra.mxu0 %v820
    %1112 = vmatprep.subr.bf16.mxu0 0
    %1113 = vmatpush2.bf16.msra.mxu0 %v819
    %1114 = vmatprep.subr.bf16.mxu0 0
    %1115 = vmatpush2.bf16.msra.mxu0 %v818
    %1116 = vmatprep.mubr.bf16.mxu0 %v447
    %1117 = vmatmul.mubr.bf16.gmra.mxu0 %v446
    %v1118 = vpop.f32.mrf.mxu0
    %v1119 = vadd.f32 %v1022, %v1118
    %v1120 = vpop.f32.mrf.mxu0
    %v1121 = vpop.f32.mrf.mxu0
    %v1122 = vadd.f32 %v1025, %v1121
    %v1123 = vpop.f32.mrf.mxu0
    %1124 = vmatprep.mubr.bf16.mxu0 %v454
    %1125 = vmatmul.mubr.bf16.gmra.mxu0 %v453
    %v1126 = vpop.f32.mrf.mxu0
    %v1127 = vadd.f32 %v1030, %v1126
    %v1128 = vpop.f32.mrf.mxu0
    %v1129 = vpop.f32.mrf.mxu0
    %v1130 = vadd.f32 %v1033, %v1129
    %v1131 = vpop.f32.mrf.mxu0
    %1132 = vmatprep.mubr.bf16.mxu0 %v461
    %1133 = vmatmul.mubr.bf16.gmra.mxu0 %v460
    %v1134 = vpop.f32.mrf.mxu0
    %v1135 = vadd.f32 %v1038, %v1134
    %v1136 = vpop.f32.mrf.mxu0
    %v1137 = vpop.f32.mrf.mxu0
    %v1138 = vadd.f32 %v1041, %v1137
    %v1139 = vpop.f32.mrf.mxu0
    %1140 = vmatprep.mubr.bf16.mxu0 %v468
    %1141 = vmatmul.mubr.bf16.gmra.mxu0 %v467
    %v1142 = vpop.f32.mrf.mxu0
    %v1143 = vadd.f32 %v1046, %v1142
    %v1144 = vpop.f32.mrf.mxu0
    %v1145 = vpop.f32.mrf.mxu0
    %v1146 = vadd.f32 %v1049, %v1145
    %v1147 = vpop.f32.mrf.mxu0
    %1148 = vmatprep.mubr.bf16.mxu0 %v475
    %1149 = vmatmul.mubr.bf16.gmra.mxu0 %v474
    %v1150 = vpop.f32.mrf.mxu0
    %v1151 = vadd.f32 %v1054, %v1150
    %v1152 = vpop.f32.mrf.mxu0
    %v1153 = vpop.f32.mrf.mxu0
    %v1154 = vadd.f32 %v1057, %v1153
    %v1155 = vpop.f32.mrf.mxu0
    %1156 = vmatprep.mubr.bf16.mxu0 %v482
    %1157 = vmatmul.mubr.bf16.gmra.mxu0 %v481
    %v1158 = vpop.f32.mrf.mxu0
    %v1159 = vadd.f32 %v1062, %v1158
    %v1160 = vpop.f32.mrf.mxu0
    %v1161 = vpop.f32.mrf.mxu0
    %v1162 = vadd.f32 %v1065, %v1161
    %v1163 = vpop.f32.mrf.mxu0
    %1164 = vmatprep.mubr.bf16.mxu0 %v489
    %1165 = vmatmul.mubr.bf16.gmra.mxu0 %v488
    %v1166 = vpop.f32.mrf.mxu0
    %v1167 = vadd.f32 %v1070, %v1166
    %v1168 = vpop.f32.mrf.mxu0
    %v1169 = vpop.f32.mrf.mxu0
    %v1170 = vadd.f32 %v1073, %v1169
    %v1171 = vpop.f32.mrf.mxu0
    %1172 = vmatprep.mubr.bf16.mxu0 %v496
    %1173 = vmatmul.mubr.bf16.gmra.mxu0 %v495
    %v1174 = vpop.f32.mrf.mxu0
    %v1175 = vadd.f32 %v1078, %v1174
    %v1176 = vpop.f32.mrf.mxu0
    %v1177 = vpop.f32.mrf.mxu0
    %v1178 = vadd.f32 %v1081, %v1177
    %v1179 = vpop.f32.mrf.mxu0
    %1180 = vdwg.mxu0
    %1181 = vmatprep.subr.bf16.mxu0 0
    %1182 = vmatpush1.bf16.msra.mxu0 %v833
    %1183 = vmatprep.subr.bf16.mxu0 0
    %1184 = vmatpush1.bf16.msra.mxu0 %v832
    %1185 = vmatprep.subr.bf16.mxu0 0
    %1186 = vmatpush1.bf16.msra.mxu0 %v831
    %1187 = vmatprep.subr.bf16.mxu0 0
    %1188 = vmatpush1.bf16.msra.mxu0 %v830
    %1189 = vmatprep.subr.bf16.mxu0 0
    %1190 = vmatpush1.bf16.msra.mxu0 %v829
    %1191 = vmatprep.subr.bf16.mxu0 0
    %1192 = vmatpush1.bf16.msra.mxu0 %v828
    %1193 = vmatprep.subr.bf16.mxu0 0
    %1194 = vmatpush1.bf16.msra.mxu0 %v827
    %1195 = vmatprep.subr.bf16.mxu0 0
    %1196 = vmatpush1.bf16.msra.mxu0 %v826
    %1197 = vmatprep.subr.bf16.mxu0 0
    %1198 = vmatpush2.bf16.msra.mxu0 0
    %1199 = vmatprep.subr.bf16.mxu0 0
    %1200 = vmatpush2.bf16.msra.mxu0 0
    %1201 = vmatprep.subr.bf16.mxu0 0
    %1202 = vmatpush2.bf16.msra.mxu0 0
    %1203 = vmatprep.subr.bf16.mxu0 0
    %1204 = vmatpush2.bf16.msra.mxu0 0
    %1205 = vmatprep.subr.bf16.mxu0 0
    %1206 = vmatpush2.bf16.msra.mxu0 0
    %1207 = vmatprep.subr.bf16.mxu0 0
    %1208 = vmatpush2.bf16.msra.mxu0 0
    %1209 = vmatprep.subr.bf16.mxu0 0
    %1210 = vmatpush2.bf16.msra.mxu0 0
    %1211 = vmatprep.subr.bf16.mxu0 0
    %1212 = vmatpush2.bf16.msra.mxu0 0
    %1213 = vmatprep.mubr.bf16.mxu0 0
    %1214 = vmatmul.mubr.bf16.gmra.mxu0 %v448
    %v1215 = vpop.f32.mrf.mxu0
    %v1216 = vadd.f32 %v1119, %v1215
    %v1217 = vpop.f32.mrf.mxu0
    %v1218 = vpop.f32.mrf.mxu0
    %v1219 = vadd.f32 %v1122, %v1218
    %v1220 = vpop.f32.mrf.mxu0
    %1221 = vmatprep.mubr.bf16.mxu0 0
    %1222 = vmatmul.mubr.bf16.gmra.mxu0 %v455
    %v1223 = vpop.f32.mrf.mxu0
    %v1224 = vadd.f32 %v1127, %v1223
    %v1225 = vpop.f32.mrf.mxu0
    %v1226 = vpop.f32.mrf.mxu0
    %v1227 = vadd.f32 %v1130, %v1226
    %v1228 = vpop.f32.mrf.mxu0
    %1229 = vmatprep.mubr.bf16.mxu0 0
    %1230 = vmatmul.mubr.bf16.gmra.mxu0 %v462
    %v1231 = vpop.f32.mrf.mxu0
    %v1232 = vadd.f32 %v1135, %v1231
    %v1233 = vpop.f32.mrf.mxu0
    %v1234 = vpop.f32.mrf.mxu0
    %v1235 = vadd.f32 %v1138, %v1234
    %v1236 = vpop.f32.mrf.mxu0
    %1237 = vmatprep.mubr.bf16.mxu0 0
    %1238 = vmatmul.mubr.bf16.gmra.mxu0 %v469
    %v1239 = vpop.f32.mrf.mxu0
    %v1240 = vadd.f32 %v1143, %v1239
    %v1241 = vpop.f32.mrf.mxu0
    %v1242 = vpop.f32.mrf.mxu0
    %v1243 = vadd.f32 %v1146, %v1242
    %v1244 = vpop.f32.mrf.mxu0
    %1245 = vmatprep.mubr.bf16.mxu0 0
    %1246 = vmatmul.mubr.bf16.gmra.mxu0 %v476
    %v1247 = vpop.f32.mrf.mxu0
    %v1248 = vadd.f32 %v1151, %v1247
    %v1249 = vpop.f32.mrf.mxu0
    %v1250 = vpop.f32.mrf.mxu0
    %v1251 = vadd.f32 %v1154, %v1250
    %v1252 = vpop.f32.mrf.mxu0
    %1253 = vmatprep.mubr.bf16.mxu0 0
    %1254 = vmatmul.mubr.bf16.gmra.mxu0 %v483
    %v1255 = vpop.f32.mrf.mxu0
    %v1256 = vadd.f32 %v1159, %v1255
    %v1257 = vpop.f32.mrf.mxu0
    %v1258 = vpop.f32.mrf.mxu0
    %v1259 = vadd.f32 %v1162, %v1258
    %v1260 = vpop.f32.mrf.mxu0
    %1261 = vmatprep.mubr.bf16.mxu0 0
    %1262 = vmatmul.mubr.bf16.gmra.mxu0 %v490
    %v1263 = vpop.f32.mrf.mxu0
    %v1264 = vadd.f32 %v1167, %v1263
    %v1265 = vpop.f32.mrf.mxu0
    %v1266 = vpop.f32.mrf.mxu0
    %v1267 = vadd.f32 %v1170, %v1266
    %v1268 = vpop.f32.mrf.mxu0
    %1269 = vmatprep.mubr.bf16.mxu0 0
    %1270 = vmatmul.mubr.bf16.gmra.mxu0 %v497
    %v1271 = vpop.f32.mrf.mxu0
    %v1272 = vadd.f32 %v1175, %v1271
    %v1273 = vpop.f32.mrf.mxu0
    %v1274 = vpop.f32.mrf.mxu0
    %v1275 = vadd.f32 %v1178, %v1274
    %v1276 = vpop.f32.mrf.mxu0
    %1277 = vdwg.mxu0
    %v1278 = vmax.f32 %v1216, 0.0
    %v1279 = vmax.f32 %v1219, 0.0
    %v1280 = vmax.f32 %v1224, 0.0
    %v1281 = vmax.f32 %v1227, 0.0
    %v1282 = vmax.f32 %v1232, 0.0
    %v1283 = vmax.f32 %v1235, 0.0
    %v1284 = vmax.f32 %v1240, 0.0
    %v1285 = vmax.f32 %v1243, 0.0
    %v1286 = vmax.f32 %v1248, 0.0
    %v1287 = vmax.f32 %v1251, 0.0
    %v1288 = vmax.f32 %v1256, 0.0
    %v1289 = vmax.f32 %v1259, 0.0
    %v1290 = vmax.f32 %v1264, 0.0
    %v1291 = vmax.f32 %v1267, 0.0
    %v1292 = vmax.f32 %v1272, 0.0
    %v1293 = vmax.f32 %v1275, 0.0
    %v1294 = vpack.c.bf16 %v1279, %v1278
    %v1295 = vpack.c.bf16 %v1281, %v1280
    %v1296 = vpack.c.bf16 %v1283, %v1282
    %v1297 = vpack.c.bf16 %v1285, %v1284
    %v1298 = vpack.c.bf16 %v1287, %v1286
    %v1299 = vpack.c.bf16 %v1289, %v1288
    %v1300 = vpack.c.bf16 %v1291, %v1290
    %v1301 = vpack.c.bf16 %v1293, %v1292
    %v1302 = vld [vmem:[#allocation7] sm:$0xf]
    %v1303 = vld [vmem:[#allocation7 + $0x4] sm:$0xf]
    %v1304 = vld [vmem:[#allocation7 + $0x8] sm:$0xf]
    %v1305 = vld [vmem:[#allocation7 + $0xc] sm:$0xf]
    %v1306 = vld [vmem:[#allocation7 + $0x10] sm:$0xf]
    %v1307 = vld [vmem:[#allocation7 + $0x14] sm:$0xf]
    %v1308 = vld [vmem:[#allocation7 + $0x18] sm:$0xf]
    %v1309 = vld [vmem:[#allocation7 + $0x1c] sm:$0xf]
    %v1310 = vld [vmem:[#allocation7 + $0x20] sm:$0xf]
    %v1311 = vld [vmem:[#allocation7 + $0x24] sm:$0xf]
    %v1312 = vld [vmem:[#allocation7 + $0x28] sm:$0xf]
    %v1313 = vld [vmem:[#allocation7 + $0x2c] sm:$0xf]
    %v1314 = vld [vmem:[#allocation7 + $0x30] sm:$0xf]
    %v1315 = vld [vmem:[#allocation7 + $0x34] sm:$0xf]
    %v1316 = vld [vmem:[#allocation7 + $0x38] sm:$0xf]
    %v1317 = vld [vmem:[#allocation7 + $0x3c] sm:$0xf]
    %v1318 = vld [vmem:[%s4] sm:$0x1]
    %v1320 = vlaneseq
    %v1321 = vshrl.u32 %v1320, 7
    %v1322 = vsub.s32 0, %v1321
    %v1323 = vrot.slane %v1318, %v1322
    %v1341 = vunpack.c.l.b16 %v1302
    %v1342 = vunpack.c.l.b16 %v1303
    %v1343 = vunpack.c.l.b16 %v1304
    %v1344 = vunpack.c.l.b16 %v1305
    %v1345 = vunpack.c.l.b16 %v1306
    %v1346 = vunpack.c.l.b16 %v1307
    %v1347 = vunpack.c.l.b16 %v1308
    %v1348 = vunpack.c.l.b16 %v1309
    %v1349 = vunpack.c.l.b16 %v1310
    %v1350 = vunpack.c.l.b16 %v1311
    %v1351 = vunpack.c.l.b16 %v1312
    %v1352 = vunpack.c.l.b16 %v1313
    %v1353 = vunpack.c.l.b16 %v1314
    %v1354 = vunpack.c.l.b16 %v1315
    %v1355 = vunpack.c.l.b16 %v1316
    %v1356 = vunpack.c.l.b16 %v1317
    %v1357 = vpack.c.b16 %v1342, %v1341
    %v1358 = vpack.c.b16 %v1344, %v1343
    %v1359 = vpack.c.b16 %v1346, %v1345
    %v1360 = vpack.c.b16 %v1348, %v1347
    %v1361 = vpack.c.b16 %v1350, %v1349
    %v1362 = vpack.c.b16 %v1352, %v1351
    %v1363 = vpack.c.b16 %v1354, %v1353
    %v1364 = vpack.c.b16 %v1356, %v1355
    %1373 = vmatprep.subr.bf16.mxu0 0
    %1374 = vmatpush1.bf16.msra.mxu0 %v1364
    %1375 = vmatprep.subr.bf16.mxu0 0
    %1376 = vmatpush1.bf16.msra.mxu0 %v1363
    %1377 = vmatprep.subr.bf16.mxu0 0
    %1378 = vmatpush1.bf16.msra.mxu0 %v1362
    %1379 = vmatprep.subr.bf16.mxu0 0
    %1380 = vmatpush1.bf16.msra.mxu0 %v1361
    %1381 = vmatprep.subr.bf16.mxu0 0
    %1382 = vmatpush1.bf16.msra.mxu0 %v1360
    %1383 = vmatprep.subr.bf16.mxu0 0
    %1384 = vmatpush1.bf16.msra.mxu0 %v1359
    %1385 = vmatprep.subr.bf16.mxu0 0
    %1386 = vmatpush1.bf16.msra.mxu0 %v1358
    %1387 = vmatprep.subr.bf16.mxu0 0
    %1388 = vmatpush1.bf16.msra.mxu0 %v1357
    %1389 = vmatprep.subr.bf16.mxu0 0
    %1390 = vmatpush2.bf16.msra.mxu0 0
    %1391 = vmatprep.subr.bf16.mxu0 0
    %1392 = vmatpush2.bf16.msra.mxu0 0
    %1393 = vmatprep.subr.bf16.mxu0 0
    %1394 = vmatpush2.bf16.msra.mxu0 0
    %1395 = vmatprep.subr.bf16.mxu0 0
    %1396 = vmatpush2.bf16.msra.mxu0 0
    %1397 = vmatprep.subr.bf16.mxu0 0
    %1398 = vmatpush2.bf16.msra.mxu0 0
    %1399 = vmatprep.subr.bf16.mxu0 0
    %1400 = vmatpush2.bf16.msra.mxu0 0
    %1401 = vmatprep.subr.bf16.mxu0 0
    %1402 = vmatpush2.bf16.msra.mxu0 0
    %1403 = vmatprep.subr.bf16.mxu0 0
    %1404 = vmatpush2.bf16.msra.mxu0 0
    %1405 = vmatprep.mubr.bf16.mxu0 0
    %1406 = vmatmul.mubr.bf16.gmra.mxu0 %v1294
    %v1407 = vpop.f32.mrf.mxu0
    %v1408 = vadd.f32 %v1323, %v1407
    %v1409 = vpop.f32.mrf.mxu0
    %v1410 = vpop.f32.mrf.mxu0
    %v1411 = vadd.f32 %v1323, %v1410
    %v1412 = vpop.f32.mrf.mxu0
    %1413 = vmatprep.mubr.bf16.mxu0 0
    %1414 = vmatmul.mubr.bf16.gmra.mxu0 %v1295
    %v1415 = vpop.f32.mrf.mxu0
    %v1416 = vadd.f32 %v1323, %v1415
    %v1417 = vpop.f32.mrf.mxu0
    %v1418 = vpop.f32.mrf.mxu0
    %v1419 = vadd.f32 %v1323, %v1418
    %v1420 = vpop.f32.mrf.mxu0
    %1421 = vmatprep.mubr.bf16.mxu0 0
    %1422 = vmatmul.mubr.bf16.gmra.mxu0 %v1296
    %v1423 = vpop.f32.mrf.mxu0
    %v1424 = vadd.f32 %v1323, %v1423
    %v1425 = vpop.f32.mrf.mxu0
    %v1426 = vpop.f32.mrf.mxu0
    %v1427 = vadd.f32 %v1323, %v1426
    %v1428 = vpop.f32.mrf.mxu0
    %1429 = vmatprep.mubr.bf16.mxu0 0
    %1430 = vmatmul.mubr.bf16.gmra.mxu0 %v1297
    %v1431 = vpop.f32.mrf.mxu0
    %v1432 = vadd.f32 %v1323, %v1431
    %v1433 = vpop.f32.mrf.mxu0
    %v1434 = vpop.f32.mrf.mxu0
    %v1435 = vadd.f32 %v1323, %v1434
    %v1436 = vpop.f32.mrf.mxu0
    %1437 = vmatprep.mubr.bf16.mxu0 0
    %1438 = vmatmul.mubr.bf16.gmra.mxu0 %v1298
    %v1439 = vpop.f32.mrf.mxu0
    %v1440 = vadd.f32 %v1323, %v1439
    %v1441 = vpop.f32.mrf.mxu0
    %v1442 = vpop.f32.mrf.mxu0
    %v1443 = vadd.f32 %v1323, %v1442
    %v1444 = vpop.f32.mrf.mxu0
    %1445 = vmatprep.mubr.bf16.mxu0 0
    %1446 = vmatmul.mubr.bf16.gmra.mxu0 %v1299
    %v1447 = vpop.f32.mrf.mxu0
    %v1448 = vadd.f32 %v1323, %v1447
    %v1449 = vpop.f32.mrf.mxu0
    %v1450 = vpop.f32.mrf.mxu0
    %v1451 = vadd.f32 %v1323, %v1450
    %v1452 = vpop.f32.mrf.mxu0
    %1453 = vmatprep.mubr.bf16.mxu0 0
    %1454 = vmatmul.mubr.bf16.gmra.mxu0 %v1300
    %v1455 = vpop.f32.mrf.mxu0
    %v1456 = vadd.f32 %v1323, %v1455
    %v1457 = vpop.f32.mrf.mxu0
    %v1458 = vpop.f32.mrf.mxu0
    %v1459 = vadd.f32 %v1323, %v1458
    %v1460 = vpop.f32.mrf.mxu0
    %1461 = vmatprep.mubr.bf16.mxu0 0
    %1462 = vmatmul.mubr.bf16.gmra.mxu0 %v1301
    %v1463 = vpop.f32.mrf.mxu0
    %v1464 = vadd.f32 %v1323, %v1463
    %v1465 = vpop.f32.mrf.mxu0
    %v1466 = vpop.f32.mrf.mxu0
    %v1467 = vadd.f32 %v1323, %v1466
    %v1468 = vpop.f32.mrf.mxu0
    %1469 = vdwg.mxu0
    %v1470 = vpack.c.bf16 %v1411, %v1408
    %v1471 = vpack.c.bf16 %v1419, %v1416
    %v1472 = vpack.c.bf16 %v1427, %v1424
    %v1473 = vpack.c.bf16 %v1435, %v1432
    %v1474 = vpack.c.bf16 %v1443, %v1440
    %v1475 = vpack.c.bf16 %v1451, %v1448
    %v1476 = vpack.c.bf16 %v1459, %v1456
    %v1477 = vpack.c.bf16 %v1467, %v1464
    %v1478 = vld [vmem:[#allocation8] sm:$0xf]
    %v1479 = vld [vmem:[#allocation8 + $0x4] sm:$0xf]
    %v1480 = vld [vmem:[#allocation8 + $0x8] sm:$0xf]
    %v1481 = vld [vmem:[#allocation8 + $0xc] sm:$0xf]
    %v1482 = vld [vmem:[#allocation8 + $0x10] sm:$0xf]
    %v1483 = vld [vmem:[#allocation8 + $0x14] sm:$0xf]
    %v1484 = vld [vmem:[#allocation8 + $0x18] sm:$0xf]
    %v1485 = vld [vmem:[#allocation8 + $0x1c] sm:$0xf]
    %v1486 = vld [vmem:[#allocation8 + $0x20] sm:$0xf]
    %v1487 = vld [vmem:[#allocation8 + $0x24] sm:$0xf]
    %v1488 = vld [vmem:[#allocation8 + $0x28] sm:$0xf]
    %v1489 = vld [vmem:[#allocation8 + $0x2c] sm:$0xf]
    %v1490 = vld [vmem:[#allocation8 + $0x30] sm:$0xf]
    %v1491 = vld [vmem:[#allocation8 + $0x34] sm:$0xf]
    %v1492 = vld [vmem:[#allocation8 + $0x38] sm:$0xf]
    %v1493 = vld [vmem:[#allocation8 + $0x3c] sm:$0xf]
    %v1494 = vld [vmem:[%s6] sm:$0x1]
    %v1496 = vlaneseq
    %v1497 = vshrl.u32 %v1496, 7
    %v1498 = vsub.s32 0, %v1497
    %v1499 = vrot.slane %v1494, %v1498
    %v1517 = vunpack.c.l.b16 %v1478
    %v1518 = vunpack.c.l.b16 %v1479
    %v1519 = vunpack.c.l.b16 %v1480
    %v1520 = vunpack.c.l.b16 %v1481
    %v1521 = vunpack.c.l.b16 %v1482
    %v1522 = vunpack.c.l.b16 %v1483
    %v1523 = vunpack.c.l.b16 %v1484
    %v1524 = vunpack.c.l.b16 %v1485
    %v1525 = vunpack.c.l.b16 %v1486
    %v1526 = vunpack.c.l.b16 %v1487
    %v1527 = vunpack.c.l.b16 %v1488
    %v1528 = vunpack.c.l.b16 %v1489
    %v1529 = vunpack.c.l.b16 %v1490
    %v1530 = vunpack.c.l.b16 %v1491
    %v1531 = vunpack.c.l.b16 %v1492
    %v1532 = vunpack.c.l.b16 %v1493
    %v1533 = vpack.c.b16 %v1518, %v1517
    %v1534 = vpack.c.b16 %v1520, %v1519
    %v1535 = vpack.c.b16 %v1522, %v1521
    %v1536 = vpack.c.b16 %v1524, %v1523
    %v1537 = vpack.c.b16 %v1526, %v1525
    %v1538 = vpack.c.b16 %v1528, %v1527
    %v1539 = vpack.c.b16 %v1530, %v1529
    %v1540 = vpack.c.b16 %v1532, %v1531
    %1549 = vmatprep.subr.bf16.mxu0 0
    %1550 = vmatpush1.bf16.msra.mxu0 %v1540
    %1551 = vmatprep.subr.bf16.mxu0 0
    %1552 = vmatpush1.bf16.msra.mxu0 %v1539
    %1553 = vmatprep.subr.bf16.mxu0 0
    %1554 = vmatpush1.bf16.msra.mxu0 %v1538
    %1555 = vmatprep.subr.bf16.mxu0 0
    %1556 = vmatpush1.bf16.msra.mxu0 %v1537
    %1557 = vmatprep.subr.bf16.mxu0 0
    %1558 = vmatpush1.bf16.msra.mxu0 %v1536
    %1559 = vmatprep.subr.bf16.mxu0 0
    %1560 = vmatpush1.bf16.msra.mxu0 %v1535
    %1561 = vmatprep.subr.bf16.mxu0 0
    %1562 = vmatpush1.bf16.msra.mxu0 %v1534
    %1563 = vmatprep.subr.bf16.mxu0 0
    %1564 = vmatpush1.bf16.msra.mxu0 %v1533
    %1565 = vmatprep.subr.bf16.mxu0 0
    %1566 = vmatpush2.bf16.msra.mxu0 0
    %1567 = vmatprep.subr.bf16.mxu0 0
    %1568 = vmatpush2.bf16.msra.mxu0 0
    %1569 = vmatprep.subr.bf16.mxu0 0
    %1570 = vmatpush2.bf16.msra.mxu0 0
    %1571 = vmatprep.subr.bf16.mxu0 0
    %1572 = vmatpush2.bf16.msra.mxu0 0
    %1573 = vmatprep.subr.bf16.mxu0 0
    %1574 = vmatpush2.bf16.msra.mxu0 0
    %1575 = vmatprep.subr.bf16.mxu0 0
    %1576 = vmatpush2.bf16.msra.mxu0 0
    %1577 = vmatprep.subr.bf16.mxu0 0
    %1578 = vmatpush2.bf16.msra.mxu0 0
    %1579 = vmatprep.subr.bf16.mxu0 0
    %1580 = vmatpush2.bf16.msra.mxu0 0
    %1581 = vmatprep.mubr.bf16.mxu0 0
    %1582 = vmatmul.mubr.bf16.gmra.mxu0 %v1470
    %v1583 = vpop.f32.mrf.mxu0
    %v1584 = vadd.f32 %v1499, %v1583
    %v1585 = vpop.f32.mrf.mxu0
    %v1586 = vpop.f32.mrf.mxu0
    %v1587 = vadd.f32 %v1499, %v1586
    %v1588 = vpop.f32.mrf.mxu0
    %1589 = vmatprep.mubr.bf16.mxu0 0
    %1590 = vmatmul.mubr.bf16.gmra.mxu0 %v1471
    %v1591 = vpop.f32.mrf.mxu0
    %v1592 = vadd.f32 %v1499, %v1591
    %v1593 = vpop.f32.mrf.mxu0
    %v1594 = vpop.f32.mrf.mxu0
    %v1595 = vadd.f32 %v1499, %v1594
    %v1596 = vpop.f32.mrf.mxu0
    %1597 = vmatprep.mubr.bf16.mxu0 0
    %1598 = vmatmul.mubr.bf16.gmra.mxu0 %v1472
    %v1599 = vpop.f32.mrf.mxu0
    %v1600 = vadd.f32 %v1499, %v1599
    %v1601 = vpop.f32.mrf.mxu0
    %v1602 = vpop.f32.mrf.mxu0
    %v1603 = vadd.f32 %v1499, %v1602
    %v1604 = vpop.f32.mrf.mxu0
    %1605 = vmatprep.mubr.bf16.mxu0 0
    %1606 = vmatmul.mubr.bf16.gmra.mxu0 %v1473
    %v1607 = vpop.f32.mrf.mxu0
    %v1608 = vadd.f32 %v1499, %v1607
    %v1609 = vpop.f32.mrf.mxu0
    %v1610 = vpop.f32.mrf.mxu0
    %v1611 = vadd.f32 %v1499, %v1610
    %v1612 = vpop.f32.mrf.mxu0
    %1613 = vmatprep.mubr.bf16.mxu0 0
    %1614 = vmatmul.mubr.bf16.gmra.mxu0 %v1474
    %v1615 = vpop.f32.mrf.mxu0
    %v1616 = vadd.f32 %v1499, %v1615
    %v1617 = vpop.f32.mrf.mxu0
    %v1618 = vpop.f32.mrf.mxu0
    %v1619 = vadd.f32 %v1499, %v1618
    %v1620 = vpop.f32.mrf.mxu0
    %1621 = vmatprep.mubr.bf16.mxu0 0
    %1622 = vmatmul.mubr.bf16.gmra.mxu0 %v1475
    %v1623 = vpop.f32.mrf.mxu0
    %v1624 = vadd.f32 %v1499, %v1623
    %v1625 = vpop.f32.mrf.mxu0
    %v1626 = vpop.f32.mrf.mxu0
    %v1627 = vadd.f32 %v1499, %v1626
    %v1628 = vpop.f32.mrf.mxu0
    %1629 = vmatprep.mubr.bf16.mxu0 0
    %1630 = vmatmul.mubr.bf16.gmra.mxu0 %v1476
    %v1631 = vpop.f32.mrf.mxu0
    %v1632 = vadd.f32 %v1499, %v1631
    %v1633 = vpop.f32.mrf.mxu0
    %v1634 = vpop.f32.mrf.mxu0
    %v1635 = vadd.f32 %v1499, %v1634
    %v1636 = vpop.f32.mrf.mxu0
    %1637 = vmatprep.mubr.bf16.mxu0 0
    %1638 = vmatmul.mubr.bf16.gmra.mxu0 %v1477
    %v1639 = vpop.f32.mrf.mxu0
    %v1640 = vadd.f32 %v1499, %v1639
    %v1641 = vpop.f32.mrf.mxu0
    %v1642 = vpop.f32.mrf.mxu0
    %v1643 = vadd.f32 %v1499, %v1642
    %v1644 = vpop.f32.mrf.mxu0
    %1645 = vdwg.mxu0
    %1646 = vmax.xlane.f32.xlu0 %v1584
    %v1647 = vpop.xlane.xlu0 %1646
    %1648 = vmax.xlane.f32.xlu0 %v1587
    %v1649 = vpop.xlane.xlu0 %1648
    %1650 = vmax.xlane.f32.xlu0 %v1592
    %v1651 = vpop.xlane.xlu0 %1650
    %1652 = vmax.xlane.f32.xlu0 %v1595
    %v1653 = vpop.xlane.xlu0 %1652
    %1654 = vmax.xlane.f32.xlu0 %v1600
    %v1655 = vpop.xlane.xlu0 %1654
    %1656 = vmax.xlane.f32.xlu0 %v1603
    %v1657 = vpop.xlane.xlu0 %1656
    %1658 = vmax.xlane.f32.xlu0 %v1608
    %v1659 = vpop.xlane.xlu0 %1658
    %1660 = vmax.xlane.f32.xlu0 %v1611
    %v1661 = vpop.xlane.xlu0 %1660
    %1662 = vmax.xlane.f32.xlu0 %v1616
    %v1663 = vpop.xlane.xlu0 %1662
    %1664 = vmax.xlane.f32.xlu0 %v1619
    %v1665 = vpop.xlane.xlu0 %1664
    %1666 = vmax.xlane.f32.xlu0 %v1624
    %v1667 = vpop.xlane.xlu0 %1666
    %1668 = vmax.xlane.f32.xlu0 %v1627
    %v1669 = vpop.xlane.xlu0 %1668
    %1670 = vmax.xlane.f32.xlu0 %v1632
    %v1671 = vpop.xlane.xlu0 %1670
    %1672 = vmax.xlane.f32.xlu0 %v1635
    %v1673 = vpop.xlane.xlu0 %1672
    %1674 = vmax.xlane.f32.xlu0 %v1640
    %v1675 = vpop.xlane.xlu0 %1674
    %1676 = vmax.xlane.f32.xlu0 %v1643
    %v1677 = vpop.xlane.xlu0 %1676
    %v1678 = vsub.f32 %v1584, %v1647
    %v1679 = vsub.f32 %v1587, %v1649
    %v1680 = vsub.f32 %v1592, %v1651
    %v1681 = vsub.f32 %v1595, %v1653
    %v1682 = vsub.f32 %v1600, %v1655
    %v1683 = vsub.f32 %v1603, %v1657
    %v1684 = vsub.f32 %v1608, %v1659
    %v1685 = vsub.f32 %v1611, %v1661
    %v1686 = vsub.f32 %v1616, %v1663
    %v1687 = vsub.f32 %v1619, %v1665
    %v1688 = vsub.f32 %v1624, %v1667
    %v1689 = vsub.f32 %v1627, %v1669
    %v1690 = vsub.f32 %v1632, %v1671
    %v1691 = vsub.f32 %v1635, %v1673
    %v1692 = vsub.f32 %v1640, %v1675
    %v1693 = vsub.f32 %v1643, %v1677
    %v1694 = vmul.f32 %v1678, 1.442695
    %v1695 = vpow.pop %v1694
    %v1696 = vmul.f32 %v1679, 1.442695
    %v1697 = vpow.pop %v1696
    %v1698 = vmul.f32 %v1680, 1.442695
    %v1699 = vpow.pop %v1698
    %v1700 = vmul.f32 %v1681, 1.442695
    %v1701 = vpow.pop %v1700
    %v1702 = vmul.f32 %v1682, 1.442695
    %v1703 = vpow.pop %v1702
    %v1704 = vmul.f32 %v1683, 1.442695
    %v1705 = vpow.pop %v1704
    %v1706 = vmul.f32 %v1684, 1.442695
    %v1707 = vpow.pop %v1706
    %v1708 = vmul.f32 %v1685, 1.442695
    %v1709 = vpow.pop %v1708
    %v1710 = vmul.f32 %v1686, 1.442695
    %v1711 = vpow.pop %v1710
    %v1712 = vmul.f32 %v1687, 1.442695
    %v1713 = vpow.pop %v1712
    %v1714 = vmul.f32 %v1688, 1.442695
    %v1715 = vpow.pop %v1714
    %v1716 = vmul.f32 %v1689, 1.442695
    %v1717 = vpow.pop %v1716
    %v1718 = vmul.f32 %v1690, 1.442695
    %v1719 = vpow.pop %v1718
    %v1720 = vmul.f32 %v1691, 1.442695
    %v1721 = vpow.pop %v1720
    %v1722 = vmul.f32 %v1692, 1.442695
    %v1723 = vpow.pop %v1722
    %v1724 = vmul.f32 %v1693, 1.442695
    %v1725 = vpow.pop %v1724
    %1726 = vadd.xlane.f32.xlu0 %v1695
    %v1727 = vpop.xlane.xlu0 %1726
    %1728 = vadd.xlane.f32.xlu0 %v1697
    %v1729 = vpop.xlane.xlu0 %1728
    %1730 = vadd.xlane.f32.xlu0 %v1699
    %v1731 = vpop.xlane.xlu0 %1730
    %1732 = vadd.xlane.f32.xlu0 %v1701
    %v1733 = vpop.xlane.xlu0 %1732
    %1734 = vadd.xlane.f32.xlu0 %v1703
    %v1735 = vpop.xlane.xlu0 %1734
    %1736 = vadd.xlane.f32.xlu0 %v1705
    %v1737 = vpop.xlane.xlu0 %1736
    %1738 = vadd.xlane.f32.xlu0 %v1707
    %v1739 = vpop.xlane.xlu0 %1738
    %1740 = vadd.xlane.f32.xlu0 %v1709
    %v1741 = vpop.xlane.xlu0 %1740
    %1742 = vadd.xlane.f32.xlu0 %v1711
    %v1743 = vpop.xlane.xlu0 %1742
    %1744 = vadd.xlane.f32.xlu0 %v1713
    %v1745 = vpop.xlane.xlu0 %1744
    %1746 = vadd.xlane.f32.xlu0 %v1715
    %v1747 = vpop.xlane.xlu0 %1746
    %1748 = vadd.xlane.f32.xlu0 %v1717
    %v1749 = vpop.xlane.xlu0 %1748
    %1750 = vadd.xlane.f32.xlu0 %v1719
    %v1751 = vpop.xlane.xlu0 %1750
    %1752 = vadd.xlane.f32.xlu0 %v1721
    %v1753 = vpop.xlane.xlu0 %1752
    %1754 = vadd.xlane.f32.xlu0 %v1723
    %v1755 = vpop.xlane.xlu0 %1754
    %1756 = vadd.xlane.f32.xlu0 %v1725
    %v1757 = vpop.xlane.xlu0 %1756
    %v1758 = vrcp.pop %v1727
    %v1759 = vrcp.pop %v1729
    %v1760 = vrcp.pop %v1731
    %v1761 = vrcp.pop %v1733
    %v1762 = vrcp.pop %v1735
    %v1763 = vrcp.pop %v1737
    %v1764 = vrcp.pop %v1739
    %v1765 = vrcp.pop %v1741
    %v1766 = vrcp.pop %v1743
    %v1767 = vrcp.pop %v1745
    %v1768 = vrcp.pop %v1747
    %v1769 = vrcp.pop %v1749
    %v1770 = vrcp.pop %v1751
    %v1771 = vrcp.pop %v1753
    %v1772 = vrcp.pop %v1755
    %v1773 = vrcp.pop %v1757
    %v1774 = vmul.f32 %v1695, %v1758
    %v1775 = vmul.f32 %v1697, %v1759
    %v1776 = vmul.f32 %v1699, %v1760
    %v1777 = vmul.f32 %v1701, %v1761
    %v1778 = vmul.f32 %v1703, %v1762
    %v1779 = vmul.f32 %v1705, %v1763
    %v1780 = vmul.f32 %v1707, %v1764
    %v1781 = vmul.f32 %v1709, %v1765
    %v1782 = vmul.f32 %v1711, %v1766
    %v1783 = vmul.f32 %v1713, %v1767
    %v1784 = vmul.f32 %v1715, %v1768
    %v1785 = vmul.f32 %v1717, %v1769
    %v1786 = vmul.f32 %v1719, %v1770
    %v1787 = vmul.f32 %v1721, %v1771
    %v1788 = vmul.f32 %v1723, %v1772
    %v1789 = vmul.f32 %v1725, %v1773
    %1790 = vst [vmem:[#allocation10] sm:$0xff] %v1774
    %1791 = vst [vmem:[#allocation10 + $0x8] sm:$0xff] %v1775
    %1792 = vst [vmem:[#allocation10 + $0x10] sm:$0xff] %v1776
    %1793 = vst [vmem:[#allocation10 + $0x18] sm:$0xff] %v1777
    %1794 = vst [vmem:[#allocation10 + $0x20] sm:$0xff] %v1778
    %1795 = vst [vmem:[#allocation10 + $0x28] sm:$0xff] %v1779
    %1796 = vst [vmem:[#allocation10 + $0x30] sm:$0xff] %v1780
    %1797 = vst [vmem:[#allocation10 + $0x38] sm:$0xff] %v1781
    %1798 = vst [vmem:[#allocation10 + $0x40] sm:$0xff] %v1782
    %1799 = vst [vmem:[#allocation10 + $0x48] sm:$0xff] %v1783
    %1800 = vst [vmem:[#allocation10 + $0x50] sm:$0xff] %v1784
    %1801 = vst [vmem:[#allocation10 + $0x58] sm:$0xff] %v1785
    %1802 = vst [vmem:[#allocation10 + $0x60] sm:$0xff] %v1786
    %1803 = vst [vmem:[#allocation10 + $0x68] sm:$0xff] %v1787
    %1804 = vst [vmem:[#allocation10 + $0x70] sm:$0xff] %v1788
    %1805 = vst [vmem:[#allocation10 + $0x78] sm:$0xff] %v1789
    // Predicated region
    $region46: #{tpu_custom_call.1} parent=1 // pred_check
      _
    $region47: #{tpu_custom_call.1} parent=1 // pred_check_branch
      %1807 = sbr.rel (0) target = $region49
    $region48: #{tpu_custom_call.1} parent=1 // pred_region
      %s1809 = ssub.s32 2048, 2048
      %1810 = vsyncadd [#allocation4], %s1809
      %s1811 = sshll.u32 [#allocation10], 4
      %s1812 = int_to_ptr.vmem [resolvable:$true] %s1811
      %1817 = dma.vmem_to_hbm [thread:$0]  %s1812, 2048, %s7, [#allocation4], 128, 128, 8
    $region49: #{tpu_custom_call.1} parent=1 // pred_fallthru
      _
    // Predicated region
    $region50: #{tpu_custom_call.1} parent=1 // pred_check
      _
    $region51: #{tpu_custom_call.1} parent=1 // pred_check_branch
      %1819 = sbr.rel (0) target = $region53
    $region52: #{tpu_custom_call.1} parent=1 // pred_region
      %1820 = dma.done [#allocation4], 2048
    $region53: #{tpu_custom_call.1} parent=1 // pred_fallthru
      _
    %1821 = vsyncpa [#allocation3], 1
    %1822 = vsyncpa [#allocation6], 1
    %1823 = vsyncpa [#allocation9], 1
    %1824 = vsyncpa [#allocation4], 1

</llo_original>
